<compile_context>
chip_gen: v6e
topology: v6e:2x2x1
jax: 0.10.0
libtpu: 0.0.40
codegen_flags: <defaults>
</compile_context>

<pallas_src>
import numpy as np
import jax
import jax.numpy as jnp
from jax import lax
from jax.experimental import pallas as pl
from jax.experimental.pallas import tpu as pltpu

_SUBLANE = 8  # f32 sublane tile


def _ceil_to(x, m):
    return -(-x // m) * m


def _unetup_padding(out_h, out_w, in1_h, in1_w):
    """Exactly the padding computation from unetUp.forward (F.pad order l,r,t,b)."""
    offset = -out_w + in1_w
    offset2 = -out_h + in1_h
    if offset % 2:
        if offset2 % 2:
            padding = [offset // 2, offset // 2 + 1, offset2 // 2, offset2 // 2 + 1]
        else:
            padding = [offset // 2, offset // 2 + 1, offset2 // 2, offset2 // 2]
    elif offset2 % 2:
        padding = [offset // 2, offset // 2, offset2 // 2, offset2 // 2 + 1]
    else:
        padding = [offset // 2, offset // 2, offset2 // 2, offset2 // 2]
    return padding  # [left, right, top, bottom]


# --------------------------------------------------------------------------
# fused forward
# --------------------------------------------------------------------------
def unet_up_forward(params, inputs1_nchw, inputs2_nchw, eps=1e-5):
    """unetUp.forward(inputs1, inputs2) with is_deconv=True.  NCHW in / NCHW out."""
    f32 = jnp.float32
    N, C1, H1, W1 = inputs1_nchw.shape
    N2, C2, H2, W2 = inputs2_nchw.shape
    assert N == N2
    Cout = params["up_w"].shape[1]
    assert params["c1_w"].shape[1] == C1 + Cout, "conv1 expects cat([inputs1, up(inputs2)])"
    S1, S2 = H1 * W1, H2 * W2

    C1p = _ceil_to(C1, _SUBLANE)        # padded channel counts (sublane aligned)
    C2p = _ceil_to(C2, _SUBLANE)
    Cp = _ceil_to(Cout, _SUBLANE)
    Ccatp = C1p + Cp
    PAD = W1 + 1                        # flat-index halo for the 3x3 taps
    EXT = S1 + 2 * PAD

    # ---- static geometry (pure numpy, constant-folded under jit) ------------
    left, right, top, bottom = _unetup_padding(2 * H2, 2 * W2, H1, W1)
    assert top + bottom + 2 * H2 == H1 and left + right + 2 * W2 == W1

    # 0/1 scatter matrices: (a,b) sub-pixel of the 2x2 deconv -> flat padded S1
    spread_np = np.zeros((4, S2, S1), np.float32)
    for a in range(2):
        for b in range(2):
            ab = a * 2 + b
            for h in range(H2):
                y = top + 2 * h + a
                if not 0 <= y < H1:
                    continue
                for w in range(W2):
                    x = left + 2 * w + b
                    if 0 <= x < W1:
                        spread_np[ab, h * W2 + w, y * W1 + x] = 1.0
    covered_np = spread_np.sum(axis=(0, 1))           # 1 where deconv output lands

    cols = np.arange(S1) % W1                         # column masks for dw = -1 / +1
    masks_np = np.stack([
        (cols >= 1).astype(np.float32).reshape(1, S1),
        (cols <= W1 - 2).astype(np.float32).reshape(1, S1),
    ])                                                # (2, 1, S1)

    # ---- fold parameters into lane-dense matmul operands --------------------
    # ConvTranspose2d weight (C2, Cout, 2, 2) -> (Cp, 4*C2p), col = (a*2+b)*C2p + ci
    wup = jnp.transpose(params["up_w"].astype(f32), (1, 2, 3, 0))   # (Cout,2,2,C2)
    wup = jnp.pad(wup, ((0, Cp - Cout), (0, 0), (0, 0), (0, C2p - C2)))
    wup_mat = wup.reshape(Cp, 4 * C2p)
    bup = jnp.pad(params["up_b"].astype(f32), (0, Cp - Cout))
    bup_pat = bup[:, None] * jnp.asarray(covered_np)[None, :]       # (Cp, S1)

    def fold_conv_bn(w, b, gamma, beta, mean, var):
        # eval-mode BN folded into the conv: w' = w*scale, b' = b*scale + beta - mean*scale
        scale = gamma.astype(f32) / jnp.sqrt(var.astype(f32) + eps)
        wf = jnp.transpose(w.astype(f32), (0, 2, 3, 1)) * scale[:, None, None, None]
        bf = b.astype(f32) * scale + beta.astype(f32) - mean.astype(f32) * scale
        return wf, bf                                 # (Cout,3,3,Cin), (Cout,)

    # conv1: input channels = [inputs1 rows 0..C1p) | deconv rows C1p..C1p+Cp)]
    w1f, b1f = fold_conv_bn(params["c1_w"], params["c1_b"], params["bn1_g"],
                            params["bn1_b"], params["bn1_m"], params["bn1_v"])
    w1a = jnp.pad(w1f[..., :C1], ((0, Cp - Cout), (0, 0), (0, 0), (0, C1p - C1)))
    w1b = jnp.pad(w1f[..., C1:], ((0, Cp - Cout), (0, 0), (0, 0), (0, Cp - Cout)))
    w1_mat = jnp.concatenate([w1a, w1b], axis=-1).reshape(Cp, 9 * Ccatp)
    b1_vec = jnp.pad(b1f, (0, Cp - Cout))[:, None]                  # (Cp, 1)

    w2f, b2f = fold_conv_bn(params["c2_w"], params["c2_b"], params["bn2_g"],
                            params["bn2_b"], params["bn2_m"], params["bn2_v"])
    w2_mat = jnp.pad(w2f, ((0, 0), (0, 0), (0, 0), (0, Cp - Cout))).reshape(Cout, 9 * Cp)
    b2_vec = b2f[:, None]                                           # (Cout, 1)

    # ---- activations: NCHW -> lane-dense (N, C_padded, H*W) -----------------
    x1 = jnp.pad(inputs1_nchw.astype(f32).reshape(N, C1, S1),
                 ((0, 0), (0, C1p - C1), (0, 0)))
    x2 = jnp.pad(inputs2_nchw.astype(f32).reshape(N, C2, S2),
                 ((0, 0), (0, C2p - C2), (0, 0)))
    spread = jnp.asarray(spread_np)
    masks = jnp.asarray(masks_np)

    # ---- fused kernel: one batch element per grid step ----------------------
    def kernel(x1_ref, x2_ref, spread_ref, wup_ref, bup_ref, w1_ref, b1_ref,
               w2_ref, b2_ref, mask_ref, o_ref, ext1_ref, ext2_ref):
        xa = x1_ref[0]                                # (C1p, S1) skip connection
        xb = x2_ref[0]                                # (C2p, S2) low-res features

        # ConvTranspose2d(k=2,s=2) + F.pad, as matmuls against the scatter mats
        parts = [jnp.dot(xb, spread_ref[ab], preferred_element_type=jnp.float32)
                 for ab in range(4)]
        bmat = jnp.concatenate(parts, axis=0)         # (4*C2p, S1)
        out2 = jnp.dot(wup_ref[...], bmat,
                       preferred_element_type=jnp.float32) + bup_ref[...]

        # torch.cat([inputs1, outputs2], dim=1)
        xcat = jnp.concatenate([xa, out2], axis=0)    # (Ccatp, S1)

        def conv3x3_bn_relu(xin, ext_ref, wmat, bias):
            # zero-extended flat row buffer -> each 3x3 tap is a lane-window load
            ext_ref[...] = jnp.zeros_like(ext_ref)
            ext_ref[:, pl.ds(PAD, S1)] = xin
            taps = []
            for dh in (-1, 0, 1):
                for dw in (-1, 0, 1):
                    tap = ext_ref[:, pl.ds(PAD + dh * W1 + dw, S1)]
                    if dw != 0:                       # zero the column wrap-around
                        tap = tap * mask_ref[0 if dw < 0 else 1]
                    taps.append(tap)
            patches = jnp.concatenate(taps, axis=0)   # (9*Cin_p, S1) im2col
            y = jnp.dot(wmat, patches, preferred_element_type=jnp.float32) + bias
            return jnp.maximum(y, 0.0)                # folded BN + ReLU

        h = conv3x3_bn_relu(xcat, ext1_ref, w1_ref[...], b1_ref[...])   # (Cp, S1)
        h = conv3x3_bn_relu(h, ext2_ref, w2_ref[...], b2_ref[...])      # (Cout, S1)
        o_ref[0] = h

    const3 = lambda shape: pl.BlockSpec(shape, lambda n: (0, 0, 0))
    const2 = lambda shape: pl.BlockSpec(shape, lambda n: (0, 0))

    out = pl.pallas_call(
        kernel,
        out_shape=jax.ShapeDtypeStruct((N, Cout, S1), f32),
        grid=(N,),
        in_specs=[
            pl.BlockSpec((1, C1p, S1), lambda n: (n, 0, 0)),   # inputs1 (flat)
            pl.BlockSpec((1, C2p, S2), lambda n: (n, 0, 0)),   # inputs2 (flat)
            const3((4, S2, S1)),                               # deconv scatter mats
            const2((Cp, 4 * C2p)),                             # deconv weight
            const2((Cp, S1)),                                  # deconv bias pattern
            const2((Cp, 9 * Ccatp)),                           # conv1 weight (BN folded)
            const2((Cp, 1)),                                   # conv1 bias
            const2((Cout, 9 * Cp)),                            # conv2 weight (BN folded)
            const2((Cout, 1)),                                 # conv2 bias
            const3((2, 1, S1)),                                # 3x3 column masks
        ],
        out_specs=pl.BlockSpec((1, Cout, S1), lambda n: (n, 0, 0)),
        scratch_shapes=[
            pltpu.VMEM((Ccatp, EXT), f32),                     # conv1 halo buffer
            pltpu.VMEM((Cp, EXT), f32),                        # conv2 halo buffer
        ],
        compiler_params=pltpu.CompilerParams(
            dimension_semantics=("parallel",),
            vmem_limit_bytes=32 * 1024 * 1024,
        ),
    )(x1, x2, spread, wup_mat, bup_pat, w1_mat, b1_vec, w2_mat, b2_vec, masks)

    return out.reshape(N, Cout, H1, W1)                        # back to NCHW


# --------------------------------------------------------------------------
# pure-JAX reference (for the numerical self-check)
# --------------------------------------------------------------------------
def unet_up_reference(params, inputs1, inputs2, eps=1e-5):
    f32 = jnp.float32
    x1 = inputs1.astype(f32)
    x2 = inputs2.astype(f32)
    N, C2, H2, W2 = x2.shape
    Cout = params["up_w"].shape[1]

    # ConvTranspose2d(k=2, s=2)
    y = jnp.einsum("nchw,cdab->ndhawb", x2, params["up_w"].astype(f32),
                   precision=lax.Precision.HIGHEST)
    y = y.reshape(N, Cout, 2 * H2, 2 * W2) + params["up_b"][None, :, None, None]

    left, right, top, bottom = _unetup_padding(2 * H2, 2 * W2,
                                               inputs1.shape[2], inputs1.shape[3])
    y = lax.pad(y, jnp.float32(0.0),
                ((0, 0, 0), (0, 0, 0), (top, bottom, 0), (left, right, 0)))
    x = jnp.concatenate([x1, y], axis=1)

    def block(x, w, b, g, bt, m, v):
        out = lax.conv_general_dilated(x, w.astype(f32), (1, 1), ((1, 1), (1, 1)),
                                       dimension_numbers=("NCHW", "OIHW", "NCHW"),
                                       precision=lax.Precision.HIGHEST)
        out = out + b[None, :, None, None]
        scale = g / jnp.sqrt(v + eps)
        out = out * scale[None, :, None, None] + (bt - m * scale)[None, :, None, None]
        return jnp.maximum(out, 0.0)

    x = block(x, params["c1_w"], params["c1_b"], params["bn1_g"],
              params["bn1_b"], params["bn1_m"], params["bn1_v"])
    x = block(x, params["c2_w"], params["c2_b"], params["bn2_g"],
              params["bn2_b"], params["bn2_m"], params["bn2_v"])
    return x


def init_params(key, in_size, out_size):
    ks = jax.random.split(key, 6)
    f32 = jnp.float32
    p = {
        # ConvTranspose2d(in_size, out_size, 2, 2): weight (Cin, Cout, 2, 2)
        "up_w": 0.1 * jax.random.normal(ks[0], (in_size, out_size, 2, 2), f32),
        "up_b": 0.1 * jax.random.normal(ks[1], (out_size,), f32),
        # Conv2d(in_size, out_size, 3): weight (Cout, Cin, 3, 3)
        "c1_w": 0.1 * jax.random.normal(ks[2], (out_size, in_size, 3, 3), f32),
        "c1_b": 0.1 * jax.random.normal(ks[3], (out_size,), f32),
        # Conv2d(out_size, out_size, 3)
        "c2_w": 0.1 * jax.random.normal(ks[4], (out_size, out_size, 3, 3), f32),
        "c2_b": 0.1 * jax.random.normal(ks[5], (out_size,), f32),
    }
    ar = jnp.arange(out_size, dtype=f32)
    for i in ("1", "2"):   # BatchNorm2d(out_size), deterministic eval-mode params
        p[f"bn{i}_g"] = 1.0 + 0.1 * ar
        p[f"bn{i}_b"] = 0.01 * ar
        p[f"bn{i}_m"] = 0.05 * ar
        p[f"bn{i}_v"] = 1.0 + 0.02 * ar
    return p


if __name__ == "__main__":
    in_size, out_size = 8, 4
    key = jax.random.PRNGKey(0)
    k1, k2, kp = jax.random.split(key, 3)

    # NCHW inputs, as in PyTorch: skip connection + lower-resolution feature map
    inputs1 = jax.random.normal(k1, (2, out_size, 16, 16), jnp.float32)
    inputs2 = jax.random.normal(k2, (2, in_size, 8, 8), jnp.float32)
    params = init_params(kp, in_size, out_size)

    fwd = jax.jit(unet_up_forward)
    out = jax.block_until_ready(fwd(params, inputs1, inputs2))
    assert out.shape == (2, out_size, 16, 16), out.shape
    assert bool(jnp.all(jnp.isfinite(out)))

    ref = jax.block_until_ready(unet_up_reference(params, inputs1, inputs2))
    err = float(jnp.max(jnp.abs(out - ref)))
    assert err < 2e-2, f"max abs err vs reference = {err}"

    print("KERNEL_OK")
</pallas_src>

<mosaic_0001>
module attributes {stable_mosaic.version = 11 : i64} {
  func.func @kernel(%arg0: i32, %arg1: memref<1x8x256xf32, #tpu.memory_space<vmem>>, %arg2: memref<1x8x64xf32, #tpu.memory_space<vmem>>, %arg3: memref<4x64x256xf32, #tpu.memory_space<vmem>>, %arg4: memref<8x32xf32, #tpu.memory_space<vmem>>, %arg5: memref<8x256xf32, #tpu.memory_space<vmem>>, %arg6: memref<8x144xf32, #tpu.memory_space<vmem>>, %arg7: memref<8x1xf32, #tpu.memory_space<vmem>>, %arg8: memref<4x72xf32, #tpu.memory_space<vmem>>, %arg9: memref<4x1xf32, #tpu.memory_space<vmem>>, %arg10: memref<2x1x256xf32, #tpu.memory_space<vmem>>, %arg11: memref<1x4x256xf32, #tpu.memory_space<vmem>>, %arg12: memref<16x290xf32, #tpu.memory_space<vmem>>, %arg13: memref<8x290xf32, #tpu.memory_space<vmem>>) attributes {dimension_semantics = [#tpu.dimension_semantics<parallel>], iteration_bounds = array<i64: 2>, scalar_prefetch = 0 : i64, scratch_operands = 2 : i64, tpu.core_type = #tpu.core_type<tc>, window_params = [{transform_indices = @transform_0, window_bounds = array<i64: 1, 8, 256>}, {transform_indices = @transform_1, window_bounds = array<i64: 1, 8, 64>}, {pipeline_mode = #tpu.pipeline_mode<synchronous>, transform_indices = @transform_2, window_bounds = array<i64: 4, 64, 256>}, {pipeline_mode = #tpu.pipeline_mode<synchronous>, transform_indices = @transform_3, window_bounds = array<i64: 8, 32>}, {pipeline_mode = #tpu.pipeline_mode<synchronous>, transform_indices = @transform_4, window_bounds = array<i64: 8, 256>}, {pipeline_mode = #tpu.pipeline_mode<synchronous>, transform_indices = @transform_5, window_bounds = array<i64: 8, 144>}, {pipeline_mode = #tpu.pipeline_mode<synchronous>, transform_indices = @transform_6, window_bounds = array<i64: 8, 1>}, {pipeline_mode = #tpu.pipeline_mode<synchronous>, transform_indices = @transform_7, window_bounds = array<i64: 4, 72>}, {pipeline_mode = #tpu.pipeline_mode<synchronous>, transform_indices = @transform_8, window_bounds = array<i64: 4, 1>}, {pipeline_mode = #tpu.pipeline_mode<synchronous>, transform_indices = @transform_9, window_bounds = array<i64: 2, 1, 256>}, {transform_indices = @transform_10, window_bounds = array<i64: 1, 4, 256>}]} {
    %c0 = arith.constant 0 : index
    %c0_0 = arith.constant 0 : index
    %c0_1 = arith.constant 0 : index
    %0 = vector.load %arg1[%c0, %c0_0, %c0_1] : memref<1x8x256xf32, #tpu.memory_space<vmem>>, vector<1x8x256xf32>
    %1 = vector.shape_cast %0 : vector<1x8x256xf32> to vector<8x256xf32>
    %c0_2 = arith.constant 0 : index
    %c0_3 = arith.constant 0 : index
    %c0_4 = arith.constant 0 : index
    %2 = vector.load %arg2[%c0_2, %c0_3, %c0_4] : memref<1x8x64xf32, #tpu.memory_space<vmem>>, vector<1x8x64xf32>
    %3 = vector.shape_cast %2 : vector<1x8x64xf32> to vector<8x64xf32>
    %c0_5 = arith.constant 0 : index
    %c0_6 = arith.constant 0 : index
    %c0_7 = arith.constant 0 : index
    %4 = vector.load %arg3[%c0_5, %c0_6, %c0_7] : memref<4x64x256xf32, #tpu.memory_space<vmem>>, vector<1x64x256xf32>
    %5 = vector.shape_cast %4 : vector<1x64x256xf32> to vector<64x256xf32>
    %cst = arith.constant dense<0.000000e+00> : vector<8x256xf32>
    %6 = tpu.matmul %3, %5, %cst {dimension_numbers = #tpu.dot_dimension_numbers<[1], [0], [0], [1], [0, 0, 1, 1], [], []>} : vector<8x64xf32>, vector<64x256xf32>, vector<8x256xf32> -> vector<8x256xf32>
    %c1 = arith.constant 1 : index
    %c0_8 = arith.constant 0 : index
    %c0_9 = arith.constant 0 : index
    %7 = vector.load %arg3[%c1, %c0_8, %c0_9] : memref<4x64x256xf32, #tpu.memory_space<vmem>>, vector<1x64x256xf32>
    %8 = vector.shape_cast %7 : vector<1x64x256xf32> to vector<64x256xf32>
    %cst_10 = arith.constant dense<0.000000e+00> : vector<8x256xf32>
    %9 = tpu.matmul %3, %8, %cst_10 {dimension_numbers = #tpu.dot_dimension_numbers<[1], [0], [0], [1], [0, 0, 1, 1], [], []>} : vector<8x64xf32>, vector<64x256xf32>, vector<8x256xf32> -> vector<8x256xf32>
    %c2 = arith.constant 2 : index
    %c0_11 = arith.constant 0 : index
    %c0_12 = arith.constant 0 : index
    %10 = vector.load %arg3[%c2, %c0_11, %c0_12] : memref<4x64x256xf32, #tpu.memory_space<vmem>>, vector<1x64x256xf32>
    %11 = vector.shape_cast %10 : vector<1x64x256xf32> to vector<64x256xf32>
    %cst_13 = arith.constant dense<0.000000e+00> : vector<8x256xf32>
    %12 = tpu.matmul %3, %11, %cst_13 {dimension_numbers = #tpu.dot_dimension_numbers<[1], [0], [0], [1], [0, 0, 1, 1], [], []>} : vector<8x64xf32>, vector<64x256xf32>, vector<8x256xf32> -> vector<8x256xf32>
    %c3 = arith.constant 3 : index
    %c0_14 = arith.constant 0 : index
    %c0_15 = arith.constant 0 : index
    %13 = vector.load %arg3[%c3, %c0_14, %c0_15] : memref<4x64x256xf32, #tpu.memory_space<vmem>>, vector<1x64x256xf32>
    %14 = vector.shape_cast %13 : vector<1x64x256xf32> to vector<64x256xf32>
    %cst_16 = arith.constant dense<0.000000e+00> : vector<8x256xf32>
    %15 = tpu.matmul %3, %14, %cst_16 {dimension_numbers = #tpu.dot_dimension_numbers<[1], [0], [0], [1], [0, 0, 1, 1], [], []>} : vector<8x64xf32>, vector<64x256xf32>, vector<8x256xf32> -> vector<8x256xf32>
    %16 = tpu.concatenate %6, %9, %12, %15 in 0 : vector<8x256xf32>, vector<8x256xf32>, vector<8x256xf32>, vector<8x256xf32> -> vector<32x256xf32>
    %c0_17 = arith.constant 0 : index
    %c0_18 = arith.constant 0 : index
    %17 = vector.load %arg4[%c0_17, %c0_18] : memref<8x32xf32, #tpu.memory_space<vmem>>, vector<8x32xf32>
    %cst_19 = arith.constant dense<0.000000e+00> : vector<8x256xf32>
    %18 = tpu.matmul %17, %16, %cst_19 {dimension_numbers = #tpu.dot_dimension_numbers<[1], [0], [0], [1], [0, 0, 1, 1], [], []>} : vector<8x32xf32>, vector<32x256xf32>, vector<8x256xf32> -> vector<8x256xf32>
    %c0_20 = arith.constant 0 : index
    %c0_21 = arith.constant 0 : index
    %19 = vector.load %arg5[%c0_20, %c0_21] : memref<8x256xf32, #tpu.memory_space<vmem>>, vector<8x256xf32>
    %20 = arith.addf %18, %19 : vector<8x256xf32>
    %21 = tpu.concatenate %1, %20 in 0 : vector<8x256xf32>, vector<8x256xf32> -> vector<16x256xf32>
    %c0_22 = arith.constant 0 : index
    %c0_23 = arith.constant 0 : index
    %22 = vector.load %arg6[%c0_22, %c0_23] : memref<8x144xf32, #tpu.memory_space<vmem>>, vector<8x144xf32>
    %c0_24 = arith.constant 0 : index
    %c0_25 = arith.constant 0 : index
    %23 = vector.load %arg7[%c0_24, %c0_25] : memref<8x1xf32, #tpu.memory_space<vmem>>, vector<8x1xf32>
    %cst_26 = arith.constant 0.000000e+00 : f32
    %24 = vector.broadcast %cst_26 : f32 to vector<16x290xf32>
    %c0_27 = arith.constant 0 : index
    %c0_28 = arith.constant 0 : index
    %25 = vector.load %arg12[%c0_27, %c0_28] : memref<16x290xf32, #tpu.memory_space<vmem>>, vector<16x290xf32>
    tpu.vector_store %arg12[%c0_27, %c0_28], %24 {strides = array<i32>} : memref<16x290xf32, #tpu.memory_space<vmem>>, vector<16x290xf32>,
    %c0_29 = arith.constant 0 : index
    %c17 = arith.constant 17 : index
    %26 = vector.load %arg12[%c0_29, %c17] : memref<16x290xf32, #tpu.memory_space<vmem>>, vector<16x256xf32>
    tpu.vector_store %arg12[%c0_29, %c17], %21 {strides = array<i32>} : memref<16x290xf32, #tpu.memory_space<vmem>>, vector<16x256xf32>,
    %c0_30 = arith.constant 0 : index
    %c0_31 = arith.constant 0 : index
    %27 = vector.load %arg12[%c0_30, %c0_31] : memref<16x290xf32, #tpu.memory_space<vmem>>, vector<16x256xf32>
    %c0_32 = arith.constant 0 : index
    %c0_33 = arith.constant 0 : index
    %c0_34 = arith.constant 0 : index
    %28 = vector.load %arg10[%c0_32, %c0_33, %c0_34] : memref<2x1x256xf32, #tpu.memory_space<vmem>>, vector<1x1x256xf32>
    %29 = vector.shape_cast %28 : vector<1x1x256xf32> to vector<1x256xf32>
    %30 = vector.broadcast %29 : vector<1x256xf32> to vector<16x256xf32>
    %31 = arith.mulf %27, %30 : vector<16x256xf32>
    %c0_35 = arith.constant 0 : index
    %c1_36 = arith.constant 1 : index
    %32 = vector.load %arg12[%c0_35, %c1_36] : memref<16x290xf32, #tpu.memory_space<vmem>>, vector<16x256xf32>
    %c0_37 = arith.constant 0 : index
    %c2_38 = arith.constant 2 : index
    %33 = vector.load %arg12[%c0_37, %c2_38] : memref<16x290xf32, #tpu.memory_space<vmem>>, vector<16x256xf32>
    %c1_39 = arith.constant 1 : index
    %c0_40 = arith.constant 0 : index
    %c0_41 = arith.constant 0 : index
    %34 = vector.load %arg10[%c1_39, %c0_40, %c0_41] : memref<2x1x256xf32, #tpu.memory_space<vmem>>, vector<1x1x256xf32>
    %35 = vector.shape_cast %34 : vector<1x1x256xf32> to vector<1x256xf32>
    %36 = vector.broadcast %35 : vector<1x256xf32> to vector<16x256xf32>
    %37 = arith.mulf %33, %36 : vector<16x256xf32>
    %c0_42 = arith.constant 0 : index
    %c16 = arith.constant 16 : index
    %38 = vector.load %arg12[%c0_42, %c16] : memref<16x290xf32, #tpu.memory_space<vmem>>, vector<16x256xf32>
    %c0_43 = arith.constant 0 : index
    %c0_44 = arith.constant 0 : index
    %c0_45 = arith.constant 0 : index
    %39 = vector.load %arg10[%c0_43, %c0_44, %c0_45] : memref<2x1x256xf32, #tpu.memory_space<vmem>>, vector<1x1x256xf32>
    %40 = vector.shape_cast %39 : vector<1x1x256xf32> to vector<1x256xf32>
    %41 = vector.broadcast %40 : vector<1x256xf32> to vector<16x256xf32>
    %42 = arith.mulf %38, %41 : vector<16x256xf32>
    %c0_46 = arith.constant 0 : index
    %c17_47 = arith.constant 17 : index
    %43 = vector.load %arg12[%c0_46, %c17_47] : memref<16x290xf32, #tpu.memory_space<vmem>>, vector<16x256xf32>
    %c0_48 = arith.constant 0 : index
    %c18 = arith.constant 18 : index
    %44 = vector.load %arg12[%c0_48, %c18] : memref<16x290xf32, #tpu.memory_space<vmem>>, vector<16x256xf32>
    %c1_49 = arith.constant 1 : index
    %c0_50 = arith.constant 0 : index
    %c0_51 = arith.constant 0 : index
    %45 = vector.load %arg10[%c1_49, %c0_50, %c0_51] : memref<2x1x256xf32, #tpu.memory_space<vmem>>, vector<1x1x256xf32>
    %46 = vector.shape_cast %45 : vector<1x1x256xf32> to vector<1x256xf32>
    %47 = vector.broadcast %46 : vector<1x256xf32> to vector<16x256xf32>
    %48 = arith.mulf %44, %47 : vector<16x256xf32>
    %c0_52 = arith.constant 0 : index
    %c32 = arith.constant 32 : index
    %49 = vector.load %arg12[%c0_52, %c32] : memref<16x290xf32, #tpu.memory_space<vmem>>, vector<16x256xf32>
    %c0_53 = arith.constant 0 : index
    %c0_54 = arith.constant 0 : index
    %c0_55 = arith.constant 0 : index
    %50 = vector.load %arg10[%c0_53, %c0_54, %c0_55] : memref<2x1x256xf32, #tpu.memory_space<vmem>>, vector<1x1x256xf32>
    %51 = vector.shape_cast %50 : vector<1x1x256xf32> to vector<1x256xf32>
    %52 = vector.broadcast %51 : vector<1x256xf32> to vector<16x256xf32>
    %53 = arith.mulf %49, %52 : vector<16x256xf32>
    %c0_56 = arith.constant 0 : index
    %c33 = arith.constant 33 : index
    %54 = vector.load %arg12[%c0_56, %c33] : memref<16x290xf32, #tpu.memory_space<vmem>>, vector<16x256xf32>
    %c0_57 = arith.constant 0 : index
    %c34 = arith.constant 34 : index
    %55 = vector.load %arg12[%c0_57, %c34] : memref<16x290xf32, #tpu.memory_space<vmem>>, vector<16x256xf32>
    %c1_58 = arith.constant 1 : index
    %c0_59 = arith.constant 0 : index
    %c0_60 = arith.constant 0 : index
    %56 = vector.load %arg10[%c1_58, %c0_59, %c0_60] : memref<2x1x256xf32, #tpu.memory_space<vmem>>, vector<1x1x256xf32>
    %57 = vector.shape_cast %56 : vector<1x1x256xf32> to vector<1x256xf32>
    %58 = vector.broadcast %57 : vector<1x256xf32> to vector<16x256xf32>
    %59 = arith.mulf %55, %58 : vector<16x256xf32>
    %60 = tpu.concatenate %31, %32, %37, %42, %43, %48, %53, %54, %59 in 0 : vector<16x256xf32>, vector<16x256xf32>, vector<16x256xf32>, vector<16x256xf32>, vector<16x256xf32>, vector<16x256xf32>, vector<16x256xf32>, vector<16x256xf32>, vector<16x256xf32> -> vector<144x256xf32>
    %cst_61 = arith.constant dense<0.000000e+00> : vector<8x256xf32>
    %61 = tpu.matmul %22, %60, %cst_61 {dimension_numbers = #tpu.dot_dimension_numbers<[1], [0], [0], [1], [0, 0, 1, 1], [], []>} : vector<8x144xf32>, vector<144x256xf32>, vector<8x256xf32> -> vector<8x256xf32>
    %62 = vector.broadcast %23 : vector<8x1xf32> to vector<8x256xf32>
    %63 = arith.addf %61, %62 : vector<8x256xf32>
    %cst_62 = arith.constant 0.000000e+00 : f32
    %64 = vector.broadcast %cst_62 : f32 to vector<8x256xf32>
    %65 = arith.maximumf %63, %64 : vector<8x256xf32>
    %c0_63 = arith.constant 0 : index
    %c0_64 = arith.constant 0 : index
    %66 = vector.load %arg8[%c0_63, %c0_64] : memref<4x72xf32, #tpu.memory_space<vmem>>, vector<4x72xf32>
    %c0_65 = arith.constant 0 : index
    %c0_66 = arith.constant 0 : index
    %67 = vector.load %arg9[%c0_65, %c0_66] : memref<4x1xf32, #tpu.memory_space<vmem>>, vector<4x1xf32>
    %cst_67 = arith.constant 0.000000e+00 : f32
    %68 = vector.broadcast %cst_67 : f32 to vector<8x290xf32>
    %c0_68 = arith.constant 0 : index
    %c0_69 = arith.constant 0 : index
    %69 = vector.load %arg13[%c0_68, %c0_69] : memref<8x290xf32, #tpu.memory_space<vmem>>, vector<8x290xf32>
    tpu.vector_store %arg13[%c0_68, %c0_69], %68 {strides = array<i32>} : memref<8x290xf32, #tpu.memory_space<vmem>>, vector<8x290xf32>,
    %c0_70 = arith.constant 0 : index
    %c17_71 = arith.constant 17 : index
    %70 = vector.load %arg13[%c0_70, %c17_71] : memref<8x290xf32, #tpu.memory_space<vmem>>, vector<8x256xf32>
    tpu.vector_store %arg13[%c0_70, %c17_71], %65 {strides = array<i32>} : memref<8x290xf32, #tpu.memory_space<vmem>>, vector<8x256xf32>,
    %c0_72 = arith.constant 0 : index
    %c0_73 = arith.constant 0 : index
    %71 = vector.load %arg13[%c0_72, %c0_73] : memref<8x290xf32, #tpu.memory_space<vmem>>, vector<8x256xf32>
    %c0_74 = arith.constant 0 : index
    %c0_75 = arith.constant 0 : index
    %c0_76 = arith.constant 0 : index
    %72 = vector.load %arg10[%c0_74, %c0_75, %c0_76] : memref<2x1x256xf32, #tpu.memory_space<vmem>>, vector<1x1x256xf32>
    %73 = vector.shape_cast %72 : vector<1x1x256xf32> to vector<1x256xf32>
    %74 = vector.broadcast %73 : vector<1x256xf32> to vector<8x256xf32>
    %75 = arith.mulf %71, %74 : vector<8x256xf32>
    %c0_77 = arith.constant 0 : index
    %c1_78 = arith.constant 1 : index
    %76 = vector.load %arg13[%c0_77, %c1_78] : memref<8x290xf32, #tpu.memory_space<vmem>>, vector<8x256xf32>
    %c0_79 = arith.constant 0 : index
    %c2_80 = arith.constant 2 : index
    %77 = vector.load %arg13[%c0_79, %c2_80] : memref<8x290xf32, #tpu.memory_space<vmem>>, vector<8x256xf32>
    %c1_81 = arith.constant 1 : index
    %c0_82 = arith.constant 0 : index
    %c0_83 = arith.constant 0 : index
    %78 = vector.load %arg10[%c1_81, %c0_82, %c0_83] : memref<2x1x256xf32, #tpu.memory_space<vmem>>, vector<1x1x256xf32>
    %79 = vector.shape_cast %78 : vector<1x1x256xf32> to vector<1x256xf32>
    %80 = vector.broadcast %79 : vector<1x256xf32> to vector<8x256xf32>
    %81 = arith.mulf %77, %80 : vector<8x256xf32>
    %c0_84 = arith.constant 0 : index
    %c16_85 = arith.constant 16 : index
    %82 = vector.load %arg13[%c0_84, %c16_85] : memref<8x290xf32, #tpu.memory_space<vmem>>, vector<8x256xf32>
    %c0_86 = arith.constant 0 : index
    %c0_87 = arith.constant 0 : index
    %c0_88 = arith.constant 0 : index
    %83 = vector.load %arg10[%c0_86, %c0_87, %c0_88] : memref<2x1x256xf32, #tpu.memory_space<vmem>>, vector<1x1x256xf32>
    %84 = vector.shape_cast %83 : vector<1x1x256xf32> to vector<1x256xf32>
    %85 = vector.broadcast %84 : vector<1x256xf32> to vector<8x256xf32>
    %86 = arith.mulf %82, %85 : vector<8x256xf32>
    %c0_89 = arith.constant 0 : index
    %c17_90 = arith.constant 17 : index
    %87 = vector.load %arg13[%c0_89, %c17_90] : memref<8x290xf32, #tpu.memory_space<vmem>>, vector<8x256xf32>
    %c0_91 = arith.constant 0 : index
    %c18_92 = arith.constant 18 : index
    %88 = vector.load %arg13[%c0_91, %c18_92] : memref<8x290xf32, #tpu.memory_space<vmem>>, vector<8x256xf32>
    %c1_93 = arith.constant 1 : index
    %c0_94 = arith.constant 0 : index
    %c0_95 = arith.constant 0 : index
    %89 = vector.load %arg10[%c1_93, %c0_94, %c0_95] : memref<2x1x256xf32, #tpu.memory_space<vmem>>, vector<1x1x256xf32>
    %90 = vector.shape_cast %89 : vector<1x1x256xf32> to vector<1x256xf32>
    %91 = vector.broadcast %90 : vector<1x256xf32> to vector<8x256xf32>
    %92 = arith.mulf %88, %91 : vector<8x256xf32>
    %c0_96 = arith.constant 0 : index
    %c32_97 = arith.constant 32 : index
    %93 = vector.load %arg13[%c0_96, %c32_97] : memref<8x290xf32, #tpu.memory_space<vmem>>, vector<8x256xf32>
    %c0_98 = arith.constant 0 : index
    %c0_99 = arith.constant 0 : index
    %c0_100 = arith.constant 0 : index
    %94 = vector.load %arg10[%c0_98, %c0_99, %c0_100] : memref<2x1x256xf32, #tpu.memory_space<vmem>>, vector<1x1x256xf32>
    %95 = vector.shape_cast %94 : vector<1x1x256xf32> to vector<1x256xf32>
    %96 = vector.broadcast %95 : vector<1x256xf32> to vector<8x256xf32>
    %97 = arith.mulf %93, %96 : vector<8x256xf32>
    %c0_101 = arith.constant 0 : index
    %c33_102 = arith.constant 33 : index
    %98 = vector.load %arg13[%c0_101, %c33_102] : memref<8x290xf32, #tpu.memory_space<vmem>>, vector<8x256xf32>
    %c0_103 = arith.constant 0 : index
    %c34_104 = arith.constant 34 : index
    %99 = vector.load %arg13[%c0_103, %c34_104] : memref<8x290xf32, #tpu.memory_space<vmem>>, vector<8x256xf32>
    %c1_105 = arith.constant 1 : index
    %c0_106 = arith.constant 0 : index
    %c0_107 = arith.constant 0 : index
    %100 = vector.load %arg10[%c1_105, %c0_106, %c0_107] : memref<2x1x256xf32, #tpu.memory_space<vmem>>, vector<1x1x256xf32>
    %101 = vector.shape_cast %100 : vector<1x1x256xf32> to vector<1x256xf32>
    %102 = vector.broadcast %101 : vector<1x256xf32> to vector<8x256xf32>
    %103 = arith.mulf %99, %102 : vector<8x256xf32>
    %104 = tpu.concatenate %75, %76, %81, %86, %87, %92, %97, %98, %103 in 0 : vector<8x256xf32>, vector<8x256xf32>, vector<8x256xf32>, vector<8x256xf32>, vector<8x256xf32>, vector<8x256xf32>, vector<8x256xf32>, vector<8x256xf32>, vector<8x256xf32> -> vector<72x256xf32>
    %cst_108 = arith.constant dense<0.000000e+00> : vector<4x256xf32>
    %105 = tpu.matmul %66, %104, %cst_108 {dimension_numbers = #tpu.dot_dimension_numbers<[1], [0], [0], [1], [0, 0, 1, 1], [], []>} : vector<4x72xf32>, vector<72x256xf32>, vector<4x256xf32> -> vector<4x256xf32>
    %106 = vector.broadcast %67 : vector<4x1xf32> to vector<4x256xf32>
    %107 = arith.addf %105, %106 : vector<4x256xf32>
    %cst_109 = arith.constant 0.000000e+00 : f32
    %108 = vector.broadcast %cst_109 : f32 to vector<4x256xf32>
    %109 = arith.maximumf %107, %108 : vector<4x256xf32>
    %c0_110 = arith.constant 0 : index
    %c0_111 = arith.constant 0 : index
    %c0_112 = arith.constant 0 : index
    %110 = vector.load %arg11[%c0_110, %c0_111, %c0_112] : memref<1x4x256xf32, #tpu.memory_space<vmem>>, vector<1x4x256xf32>
    %111 = vector.shape_cast %110 : vector<1x4x256xf32> to vector<4x256xf32>
    %112 = vector.shape_cast %109 : vector<4x256xf32> to vector<1x4x256xf32>
    tpu.vector_store %arg11[%c0_110, %c0_111, %c0_112], %112 {strides = array<i32>} : memref<1x4x256xf32, #tpu.memory_space<vmem>>, vector<1x4x256xf32>,
    return
  }
  func.func @transform_0(%arg0: i32) -> (i32, i32, i32) {
    %c0_i32 = arith.constant 0 : i32
    %c0_i32_0 = arith.constant 0 : i32
    %c0_i32_1 = arith.constant 0 : i32
    return %arg0, %c0_i32, %c0_i32_0 : i32, i32, i32
  }
  func.func @transform_1(%arg0: i32) -> (i32, i32, i32) {
    %c0_i32 = arith.constant 0 : i32
    %c0_i32_0 = arith.constant 0 : i32
    %c0_i32_1 = arith.constant 0 : i32
    return %arg0, %c0_i32, %c0_i32_0 : i32, i32, i32
  }
  func.func @transform_2(%arg0: i32) -> (i32, i32, i32) {
    %c0_i32 = arith.constant 0 : i32
    %c0_i32_0 = arith.constant 0 : i32
    %c0_i32_1 = arith.constant 0 : i32
    %c0_i32_2 = arith.constant 0 : i32
    return %c0_i32, %c0_i32_0, %c0_i32_1 : i32, i32, i32
  }
  func.func @transform_3(%arg0: i32) -> (i32, i32) {
    %c0_i32 = arith.constant 0 : i32
    %c0_i32_0 = arith.constant 0 : i32
    %c0_i32_1 = arith.constant 0 : i32
    return %c0_i32, %c0_i32_0 : i32, i32
  }
  func.func @transform_4(%arg0: i32) -> (i32, i32) {
    %c0_i32 = arith.constant 0 : i32
    %c0_i32_0 = arith.constant 0 : i32
    %c0_i32_1 = arith.constant 0 : i32
    return %c0_i32, %c0_i32_0 : i32, i32
  }
  func.func @transform_5(%arg0: i32) -> (i32, i32) {
    %c0_i32 = arith.constant 0 : i32
    %c0_i32_0 = arith.constant 0 : i32
    %c0_i32_1 = arith.constant 0 : i32
    return %c0_i32, %c0_i32_0 : i32, i32
  }
  func.func @transform_6(%arg0: i32) -> (i32, i32) {
    %c0_i32 = arith.constant 0 : i32
    %c0_i32_0 = arith.constant 0 : i32
    %c0_i32_1 = arith.constant 0 : i32
    return %c0_i32, %c0_i32_0 : i32, i32
  }
  func.func @transform_7(%arg0: i32) -> (i32, i32) {
    %c0_i32 = arith.constant 0 : i32
    %c0_i32_0 = arith.constant 0 : i32
    %c0_i32_1 = arith.constant 0 : i32
    return %c0_i32, %c0_i32_0 : i32, i32
  }
  func.func @transform_8(%arg0: i32) -> (i32, i32) {
    %c0_i32 = arith.constant 0 : i32
    %c0_i32_0 = arith.constant 0 : i32
    %c0_i32_1 = arith.constant 0 : i32
    return %c0_i32, %c0_i32_0 : i32, i32
  }
  func.func @transform_9(%arg0: i32) -> (i32, i32, i32) {
    %c0_i32 = arith.constant 0 : i32
    %c0_i32_0 = arith.constant 0 : i32
    %c0_i32_1 = arith.constant 0 : i32
    %c0_i32_2 = arith.constant 0 : i32
    return %c0_i32, %c0_i32_0, %c0_i32_1 : i32, i32, i32
  }
  func.func @transform_10(%arg0: i32) -> (i32, i32, i32) {
    %c0_i32 = arith.constant 0 : i32
    %c0_i32_0 = arith.constant 0 : i32
    %c0_i32_1 = arith.constant 0 : i32
    return %arg0, %c0_i32, %c0_i32_0 : i32, i32, i32
  }
}

</mosaic_0001>

<llo_original>
// kernel: mul.17
$region0: #{mul.17}
  #allocation0 [shape = 's32[1]{0}', space=sflag, size = 0x4, scoped, tag = 'scoped memory for mul.17']
  %s0 = inlined_call_operand.vmem [shape: f32[8], index: 0, kind: input, shape index: {}]
  %s1 = inlined_call_operand.vmem [shape: f32[8,256], index: 1, kind: output, shape index: {}]
  // Predicated region
  $region2: #{mul.17} parent=0 // pred_check
    _
  $region3: #{mul.17} parent=0 // pred_check_branch
    %3 = sbr.rel (0) target = $region5
  $region4: #{mul.17} parent=0 // pred_region
    _
  $region5: #{mul.17} parent=0 // pred_fallthru
    _
  %v4 = vld [vmem:[%s0] ss:$0 sm:$0xff]
  %6 = vbcast.lane.b32.xlu0 %v4, 256
  %v7 = vpop.permute.xlu0 %6
  %8 = vst [vmem:[%s1] sm:$0xff] %v7
  %s9 = scalar_lea.vmem %s1, 8
  %10 = vst [vmem:[%s9] sm:$0xff] %v7

// kernel: unet_up_forward.1
$region0: #{unet_up_forward.1}
  #allocation0 [shape = 'u32[]', space=smem, size = 0x4, offset = 0x4, fixed_abs, tag = 'smem constant byte address 0x4 - core index']
  #allocation1 [shape = 'u32[144,128]{1,0:T(1,128)}', space=vmem, size = 0x12000, scoped, tag = 'internal scratch']
  #allocation2 [shape = 'f32[16,290]{1,0:T(8,128)}', space=vmem, size = 0x6000, scoped, tag = 'scratch operand']
  #allocation3 [shape = 'f32[8,290]{1,0:T(8,128)}', space=vmem, size = 0x3000, scoped, tag = 'scratch operand']
  %s0 = inlined_call_operand.vmem [shape: f32[2,8,256], index: 0, kind: input, shape index: {}]
  %s1 = inlined_call_operand.vmem [shape: f32[2,8,64], index: 1, kind: input, shape index: {}]
  %s2 = inlined_call_operand.vmem [shape: f32[4,64,256], index: 2, kind: input, shape index: {}]
  %s3 = inlined_call_operand.vmem [shape: f32[8,32], index: 3, kind: input, shape index: {}]
  %s4 = inlined_call_operand.vmem [shape: f32[8,256], index: 4, kind: input, shape index: {}]
  %s5 = inlined_call_operand.vmem [shape: f32[8,144], index: 5, kind: input, shape index: {}]
  %s6 = inlined_call_operand.vmem [shape: f32[8,1], index: 6, kind: input, shape index: {}]
  %s7 = inlined_call_operand.vmem [shape: f32[4,72], index: 7, kind: input, shape index: {}]
  %s8 = inlined_call_operand.vmem [shape: f32[4,1], index: 8, kind: input, shape index: {}]
  %s9 = inlined_call_operand.vmem [shape: f32[2,1,256], index: 9, kind: input, shape index: {}]
  %s10 = inlined_call_operand.vmem [shape: f32[2,4,256], index: 10, kind: output, shape index: {}]
  %s11 = sld [smem:[#allocation0]]
  $region73: #{unet_up_forward.1} parent=0
    _
  %s13 = ssub.s32 1, %s11
  %s14 = scalar_select 0, %s13, %s11
  loop: start=0, step=1, limit=4
  $region2: #{unet_up_forward.1} parent=0 // loop_pre_header
    _
  $region3: #{unet_up_forward.1} parent=0 // loop_header
    %s16 = sphi 0, %s20
    %p17 = scmp.ge.s32.totalorder %s16, 4
    %s26 = sphi 0, %s28
    %s29 = sphi 0, %s26
    %s30 = sphi 0, %s29
    %s46 = sphi 0, %s30
    %s52 = sphi 0, %s54
    %s55 = sphi 0, %s52
    %s56 = sphi 0, %s55
    %s72 = sphi 0, %s56
    %s76 = sphi 0, %s76
    %s78 = sphi 0, %s76
    %s79 = sphi 0, %s78
    %s93 = sphi 0, %s79
    %s97 = sphi 0, %s97
    %s99 = sphi 0, %s97
    %s100 = sphi 0, %s99
    %s114 = sphi 0, %s100
    %s118 = sphi 0, %s118
    %s120 = sphi 0, %s118
    %s121 = sphi 0, %s120
    %s135 = sphi 0, %s121
    %s139 = sphi 0, %s139
    %s141 = sphi 0, %s139
    %s142 = sphi 0, %s141
    %s156 = sphi 0, %s142
    %s160 = sphi 0, %s160
    %s162 = sphi 0, %s160
    %s163 = sphi 0, %s162
    %s177 = sphi 0, %s163
    %s181 = sphi 0, %s181
    %s183 = sphi 0, %s181
    %s184 = sphi 0, %s183
    %s198 = sphi 0, %s184
    %s202 = sphi 0, %s202
    %s204 = sphi 0, %s202
    %s205 = sphi 0, %s204
    %s219 = sphi 0, %s205
    %s223 = sphi 0, %s223
    %s225 = sphi 0, %s223
    %s226 = sphi 0, %s225
    %s240 = sphi 0, %s226
    %s246 = sphi 0, %s248
    %s249 = sphi 0, %s246
    %s250 = sphi 0, %s249
    %s266 = sphi 0, %s250
  $region4: #{unet_up_forward.1} parent=0 // loop_header_branch
    %19 = sbr.rel (%p17) target = $region8
  $region5: #{unet_up_forward.1} parent=0 // loop_body
    %s21 = ssub.s32 %s16, 1
    %s22 = ssub.s32 %s16, 2
    %s23 = sadd.s32 %s16, 1
    %s24 = ssub.s32 %s16, %s23
    %p25 = scmp.eq.s32.totalorder %s24, 0
    %s27 = sadd.s32 %s26, 1
    %s28 = scalar_select %p25, %s26, %s27
    %p31 = pneg %p25
    %p32 = scmp.eq.s32.totalorder %s16, 1
    %p33 = por %p31, %p32
    %p34 = scmp.ne.s32.totalorder %s26, %s29
    %p35 = scmp.eq.s32.totalorder %s16, 0
    %p36 = por %p34, %p35
    %p37 = scmp.ne.s32.totalorder %s26, %s29
    %p38 = scmp.eq.s32.totalorder %s21, 1
    %p39 = por %p37, %p38
    %p40 = scmp.ne.s32.totalorder %s29, %s30
    %p41 = scmp.eq.s32.totalorder %s21, 0
    %p42 = por %p40, %p41
    %p43 = scmp.ne.s32.totalorder %s29, %s30
    %p44 = scmp.eq.s32.totalorder %s22, 1
    %p45 = por %p43, %p44
    %p47 = scmp.ne.s32.totalorder %s30, %s46
    %p48 = scmp.eq.s32.totalorder %s22, 0
    %p49 = por %p47, %p48
    %s50 = ssub.s32 %s16, %s23
    %p51 = scmp.eq.s32.totalorder %s50, 0
    %s53 = sadd.s32 %s52, 1
    %s54 = scalar_select %p51, %s52, %s53
    %p57 = pneg %p51
    %p58 = scmp.eq.s32.totalorder %s16, 1
    %p59 = por %p57, %p58
    %p60 = scmp.ne.s32.totalorder %s52, %s55
    %p61 = scmp.eq.s32.totalorder %s16, 0
    %p62 = por %p60, %p61
    %p63 = scmp.ne.s32.totalorder %s52, %s55
    %p64 = scmp.eq.s32.totalorder %s21, 1
    %p65 = por %p63, %p64
    %p66 = scmp.ne.s32.totalorder %s55, %s56
    %p67 = scmp.eq.s32.totalorder %s21, 0
    %p68 = por %p66, %p67
    %p69 = scmp.ne.s32.totalorder %s55, %s56
    %p70 = scmp.eq.s32.totalorder %s22, 1
    %p71 = por %p69, %p70
    %p73 = scmp.ne.s32.totalorder %s56, %s72
    %p74 = scmp.eq.s32.totalorder %s22, 0
    %p75 = por %p73, %p74
    %s77 = sadd.s32 %s76, 1
    %p80 = scmp.eq.s32.totalorder %s16, 1
    %p81 = scmp.ne.s32.totalorder %s76, %s78
    %p82 = scmp.eq.s32.totalorder %s16, 0
    %p83 = por %p81, %p82
    %p84 = scmp.ne.s32.totalorder %s76, %s78
    %p85 = scmp.eq.s32.totalorder %s21, 1
    %p86 = por %p84, %p85
    %p87 = scmp.ne.s32.totalorder %s78, %s79
    %p88 = scmp.eq.s32.totalorder %s21, 0
    %p89 = por %p87, %p88
    %p90 = scmp.ne.s32.totalorder %s78, %s79
    %p91 = scmp.eq.s32.totalorder %s22, 1
    %p92 = por %p90, %p91
    %p94 = scmp.ne.s32.totalorder %s79, %s93
    %p95 = scmp.eq.s32.totalorder %s22, 0
    %p96 = por %p94, %p95
    %s98 = sadd.s32 %s97, 1
    %p101 = scmp.eq.s32.totalorder %s16, 1
    %p102 = scmp.ne.s32.totalorder %s97, %s99
    %p103 = scmp.eq.s32.totalorder %s16, 0
    %p104 = por %p102, %p103
    %p105 = scmp.ne.s32.totalorder %s97, %s99
    %p106 = scmp.eq.s32.totalorder %s21, 1
    %p107 = por %p105, %p106
    %p108 = scmp.ne.s32.totalorder %s99, %s100
    %p109 = scmp.eq.s32.totalorder %s21, 0
    %p110 = por %p108, %p109
    %p111 = scmp.ne.s32.totalorder %s99, %s100
    %p112 = scmp.eq.s32.totalorder %s22, 1
    %p113 = por %p111, %p112
    %p115 = scmp.ne.s32.totalorder %s100, %s114
    %p116 = scmp.eq.s32.totalorder %s22, 0
    %p117 = por %p115, %p116
    %s119 = sadd.s32 %s118, 1
    %p122 = scmp.eq.s32.totalorder %s16, 1
    %p123 = scmp.ne.s32.totalorder %s118, %s120
    %p124 = scmp.eq.s32.totalorder %s16, 0
    %p125 = por %p123, %p124
    %p126 = scmp.ne.s32.totalorder %s118, %s120
    %p127 = scmp.eq.s32.totalorder %s21, 1
    %p128 = por %p126, %p127
    %p129 = scmp.ne.s32.totalorder %s120, %s121
    %p130 = scmp.eq.s32.totalorder %s21, 0
    %p131 = por %p129, %p130
    %p132 = scmp.ne.s32.totalorder %s120, %s121
    %p133 = scmp.eq.s32.totalorder %s22, 1
    %p134 = por %p132, %p133
    %p136 = scmp.ne.s32.totalorder %s121, %s135
    %p137 = scmp.eq.s32.totalorder %s22, 0
    %p138 = por %p136, %p137
    %s140 = sadd.s32 %s139, 1
    %p143 = scmp.eq.s32.totalorder %s16, 1
    %p144 = scmp.ne.s32.totalorder %s139, %s141
    %p145 = scmp.eq.s32.totalorder %s16, 0
    %p146 = por %p144, %p145
    %p147 = scmp.ne.s32.totalorder %s139, %s141
    %p148 = scmp.eq.s32.totalorder %s21, 1
    %p149 = por %p147, %p148
    %p150 = scmp.ne.s32.totalorder %s141, %s142
    %p151 = scmp.eq.s32.totalorder %s21, 0
    %p152 = por %p150, %p151
    %p153 = scmp.ne.s32.totalorder %s141, %s142
    %p154 = scmp.eq.s32.totalorder %s22, 1
    %p155 = por %p153, %p154
    %p157 = scmp.ne.s32.totalorder %s142, %s156
    %p158 = scmp.eq.s32.totalorder %s22, 0
    %p159 = por %p157, %p158
    %s161 = sadd.s32 %s160, 1
    %p164 = scmp.eq.s32.totalorder %s16, 1
    %p165 = scmp.ne.s32.totalorder %s160, %s162
    %p166 = scmp.eq.s32.totalorder %s16, 0
    %p167 = por %p165, %p166
    %p168 = scmp.ne.s32.totalorder %s160, %s162
    %p169 = scmp.eq.s32.totalorder %s21, 1
    %p170 = por %p168, %p169
    %p171 = scmp.ne.s32.totalorder %s162, %s163
    %p172 = scmp.eq.s32.totalorder %s21, 0
    %p173 = por %p171, %p172
    %p174 = scmp.ne.s32.totalorder %s162, %s163
    %p175 = scmp.eq.s32.totalorder %s22, 1
    %p176 = por %p174, %p175
    %p178 = scmp.ne.s32.totalorder %s163, %s177
    %p179 = scmp.eq.s32.totalorder %s22, 0
    %p180 = por %p178, %p179
    %s182 = sadd.s32 %s181, 1
    %p185 = scmp.eq.s32.totalorder %s16, 1
    %p186 = scmp.ne.s32.totalorder %s181, %s183
    %p187 = scmp.eq.s32.totalorder %s16, 0
    %p188 = por %p186, %p187
    %p189 = scmp.ne.s32.totalorder %s181, %s183
    %p190 = scmp.eq.s32.totalorder %s21, 1
    %p191 = por %p189, %p190
    %p192 = scmp.ne.s32.totalorder %s183, %s184
    %p193 = scmp.eq.s32.totalorder %s21, 0
    %p194 = por %p192, %p193
    %p195 = scmp.ne.s32.totalorder %s183, %s184
    %p196 = scmp.eq.s32.totalorder %s22, 1
    %p197 = por %p195, %p196
    %p199 = scmp.ne.s32.totalorder %s184, %s198
    %p200 = scmp.eq.s32.totalorder %s22, 0
    %p201 = por %p199, %p200
    %s203 = sadd.s32 %s202, 1
    %p206 = scmp.eq.s32.totalorder %s16, 1
    %p207 = scmp.ne.s32.totalorder %s202, %s204
    %p208 = scmp.eq.s32.totalorder %s16, 0
    %p209 = por %p207, %p208
    %p210 = scmp.ne.s32.totalorder %s202, %s204
    %p211 = scmp.eq.s32.totalorder %s21, 1
    %p212 = por %p210, %p211
    %p213 = scmp.ne.s32.totalorder %s204, %s205
    %p214 = scmp.eq.s32.totalorder %s21, 0
    %p215 = por %p213, %p214
    %p216 = scmp.ne.s32.totalorder %s204, %s205
    %p217 = scmp.eq.s32.totalorder %s22, 1
    %p218 = por %p216, %p217
    %p220 = scmp.ne.s32.totalorder %s205, %s219
    %p221 = scmp.eq.s32.totalorder %s22, 0
    %p222 = por %p220, %p221
    %s224 = sadd.s32 %s223, 1
    %p227 = scmp.eq.s32.totalorder %s16, 1
    %p228 = scmp.ne.s32.totalorder %s223, %s225
    %p229 = scmp.eq.s32.totalorder %s16, 0
    %p230 = por %p228, %p229
    %p231 = scmp.ne.s32.totalorder %s223, %s225
    %p232 = scmp.eq.s32.totalorder %s21, 1
    %p233 = por %p231, %p232
    %p234 = scmp.ne.s32.totalorder %s225, %s226
    %p235 = scmp.eq.s32.totalorder %s21, 0
    %p236 = por %p234, %p235
    %p237 = scmp.ne.s32.totalorder %s225, %s226
    %p238 = scmp.eq.s32.totalorder %s22, 1
    %p239 = por %p237, %p238
    %p241 = scmp.ne.s32.totalorder %s226, %s240
    %p242 = scmp.eq.s32.totalorder %s22, 0
    %p243 = por %p241, %p242
    %s244 = ssub.s32 %s16, %s23
    %p245 = scmp.eq.s32.totalorder %s244, 0
    %s247 = sadd.s32 %s246, 1
    %s248 = scalar_select %p245, %s246, %s247
    %p251 = pneg %p245
    %p252 = scmp.eq.s32.totalorder %s16, 1
    %p253 = por %p251, %p252
    %p254 = scmp.ne.s32.totalorder %s246, %s249
    %p255 = scmp.eq.s32.totalorder %s16, 0
    %p256 = por %p254, %p255
    %p257 = scmp.ne.s32.totalorder %s246, %s249
    %p258 = scmp.eq.s32.totalorder %s21, 1
    %p259 = por %p257, %p258
    %p260 = scmp.ne.s32.totalorder %s249, %s250
    %p261 = scmp.eq.s32.totalorder %s21, 0
    %p262 = por %p260, %p261
    %p263 = scmp.ne.s32.totalorder %s249, %s250
    %p264 = scmp.eq.s32.totalorder %s22, 1
    %p265 = por %p263, %p264
    %p267 = scmp.ne.s32.totalorder %s250, %s266
    %p268 = scmp.eq.s32.totalorder %s22, 0
    %p269 = por %p267, %p268
    %p270 = scmp.le.s32.totalorder 1, %s16
    %p271 = scmp.lt.s32.totalorder %s16, 3
    %p272 = pnand %p270, %p271
    %p273 = pneg %p272
    // Predicated region
    $region9: #{unet_up_forward.1} parent=5 // pred_check
      _
    $region10: #{unet_up_forward.1} parent=5 // pred_check_branch
      %275 = sbr.rel (%p272) target = $region12
    $region11: #{unet_up_forward.1} parent=5 // pred_region
      %s276 = ssub.s32 %s16, 1
      // Predicated region
      $region13: #{unet_up_forward.1} parent=11 // pred_check
        %p277 = pneg %p89
      $region14: #{unet_up_forward.1} parent=11 // pred_check_branch
        %279 = sbr.rel (%p277) target = $region16
      $region15: #{unet_up_forward.1} parent=11 // pred_region
        _
      $region16: #{unet_up_forward.1} parent=11 // pred_fallthru
        _
      // Predicated region
      $region17: #{unet_up_forward.1} parent=11 // pred_check
        %p280 = pneg %p110
      $region18: #{unet_up_forward.1} parent=11 // pred_check_branch
        %282 = sbr.rel (%p280) target = $region20
      $region19: #{unet_up_forward.1} parent=11 // pred_region
        _
      $region20: #{unet_up_forward.1} parent=11 // pred_fallthru
        _
      // Predicated region
      $region21: #{unet_up_forward.1} parent=11 // pred_check
        %p283 = pneg %p131
      $region22: #{unet_up_forward.1} parent=11 // pred_check_branch
        %285 = sbr.rel (%p283) target = $region24
      $region23: #{unet_up_forward.1} parent=11 // pred_region
        _
      $region24: #{unet_up_forward.1} parent=11 // pred_fallthru
        _
      // Predicated region
      $region25: #{unet_up_forward.1} parent=11 // pred_check
        %p286 = pneg %p152
      $region26: #{unet_up_forward.1} parent=11 // pred_check_branch
        %288 = sbr.rel (%p286) target = $region28
      $region27: #{unet_up_forward.1} parent=11 // pred_region
        _
      $region28: #{unet_up_forward.1} parent=11 // pred_fallthru
        _
      // Predicated region
      $region29: #{unet_up_forward.1} parent=11 // pred_check
        %p289 = pneg %p173
      $region30: #{unet_up_forward.1} parent=11 // pred_check_branch
        %291 = sbr.rel (%p289) target = $region32
      $region31: #{unet_up_forward.1} parent=11 // pred_region
        _
      $region32: #{unet_up_forward.1} parent=11 // pred_fallthru
        _
      // Predicated region
      $region33: #{unet_up_forward.1} parent=11 // pred_check
        %p292 = pneg %p194
      $region34: #{unet_up_forward.1} parent=11 // pred_check_branch
        %294 = sbr.rel (%p292) target = $region36
      $region35: #{unet_up_forward.1} parent=11 // pred_region
        _
      $region36: #{unet_up_forward.1} parent=11 // pred_fallthru
        _
      // Predicated region
      $region37: #{unet_up_forward.1} parent=11 // pred_check
        %p295 = pneg %p215
      $region38: #{unet_up_forward.1} parent=11 // pred_check_branch
        %297 = sbr.rel (%p295) target = $region40
      $region39: #{unet_up_forward.1} parent=11 // pred_region
        _
      $region40: #{unet_up_forward.1} parent=11 // pred_fallthru
        _
      // Predicated region
      $region41: #{unet_up_forward.1} parent=11 // pred_check
        %p298 = pneg %p236
      $region42: #{unet_up_forward.1} parent=11 // pred_check_branch
        %300 = sbr.rel (%p298) target = $region44
      $region43: #{unet_up_forward.1} parent=11 // pred_region
        _
      $region44: #{unet_up_forward.1} parent=11 // pred_fallthru
        _
    $region12: #{unet_up_forward.1} parent=5 // pred_fallthru
      _
    %p301 = scmp.lt.s32.totalorder %s16, 2
    // Predicated region
    $region45: #{unet_up_forward.1} parent=5 // pred_check
      %p302 = pneg %p301
    $region46: #{unet_up_forward.1} parent=5 // pred_check_branch
      %304 = sbr.rel (%p302) target = $region48
    $region47: #{unet_up_forward.1} parent=5 // pred_region
      // Predicated region
      $region49: #{unet_up_forward.1} parent=47 // pred_check
        %p305 = pneg %p36
      $region50: #{unet_up_forward.1} parent=47 // pred_check_branch
        %307 = sbr.rel (%p305) target = $region52
      $region51: #{unet_up_forward.1} parent=47 // pred_region
        %p308 = scmp.lt.s32.totalorder %s16, 1
        %s309 = scalar_select %p308, %s16, 1
        %s310 = smul.addr %s309, 2
        %s311 = smul.addr %s310, 8
        %s312 = scalar_lea.vmem %s0, %s311
      $region52: #{unet_up_forward.1} parent=47 // pred_fallthru
        _
      // Predicated region
      $region53: #{unet_up_forward.1} parent=47 // pred_check
        %p313 = pneg %p62
      $region54: #{unet_up_forward.1} parent=47 // pred_check_branch
        %315 = sbr.rel (%p313) target = $region56
      $region55: #{unet_up_forward.1} parent=47 // pred_region
        %p316 = scmp.lt.s32.totalorder %s16, 1
        %s317 = scalar_select %p316, %s16, 1
        %s318 = smul.addr %s317, 8
        %s319 = scalar_lea.vmem %s1, %s318
      $region56: #{unet_up_forward.1} parent=47 // pred_fallthru
        _
    $region48: #{unet_up_forward.1} parent=5 // pred_fallthru
      _
    %p320 = scmp.le.s32.totalorder 1, %s16
    %p321 = scmp.lt.s32.totalorder %s16, 3
    %p322 = pnand %p320, %p321
    %p323 = pneg %p322
    // Predicated region
    $region57: #{unet_up_forward.1} parent=5 // pred_check
      _
    $region58: #{unet_up_forward.1} parent=5 // pred_check_branch
      %325 = sbr.rel (%p322) target = $region60
    $region59: #{unet_up_forward.1} parent=5 // pred_region
      %s326 = ssub.s32 %s16, 1
      %p327 = scmp.lt.s32.totalorder %s21, 1
      %s328 = scalar_select %p327, %s21, 1
      %s329 = smul.addr %s328, 2
      %s330 = smul.addr %s329, 8
      %s331 = scalar_lea.vmem %s0, %s330
      %p332 = pneg %p42
      %p333 = pneg %p39
      %p334 = scmp.lt.s32.totalorder %s21, 1
      %s335 = scalar_select %p334, %s21, 1
      %s336 = smul.addr %s335, 8
      %s337 = scalar_lea.vmem %s1, %s336
      %p338 = pneg %p68
      %p339 = pneg %p65
      %p340 = pneg %p89
      %p341 = pneg %p86
      %p342 = pneg %p110
      %p343 = pneg %p107
      %p344 = pneg %p131
      %p345 = pneg %p128
      %p346 = pneg %p152
      %p347 = pneg %p149
      %p348 = pneg %p173
      %p349 = pneg %p170
      %p350 = pneg %p194
      %p351 = pneg %p191
      %p352 = pneg %p215
      %p353 = pneg %p212
      %p354 = pneg %p236
      %p355 = pneg %p233
      %p356 = pneg %p262
      %p357 = pneg %p259
      %p358 = scmp.lt.s32.totalorder %s21, 1
      %s359 = scalar_select %p358, %s21, 1
      %s360 = smul.addr %s359, 2
      %s361 = smul.addr %s360, 4
      %s362 = scalar_lea.vmem %s10, %s361
      %p363 = scmp.lt.s32.totalorder %s21, 1
      %s364 = scalar_select %p363, %s21, 1
      %s365 = smul.addr %s364, 2
      %s366 = smul.addr %s365, 8
      %s367 = scalar_lea.vmem %s0, %s366
      %p368 = scmp.lt.s32.totalorder %s21, 1
      %s369 = scalar_select %p368, %s21, 1
      %s370 = smul.addr %s369, 8
      %s371 = scalar_lea.vmem %s1, %s370
      %p372 = scmp.lt.s32.totalorder %s21, 1
      %s373 = scalar_select %p372, %s21, 1
      %s374 = smul.addr %s373, 2
      %s375 = smul.addr %s374, 4
      %s376 = scalar_lea.vmem %s10, %s375
      %v377 = vld [vmem:[%s367] sm:$0xff]
      %v378 = vld [vmem:[%s367 + $0x8] sm:$0xff]
      %v379 = vld [vmem:[%s371] sm:$0xff]
      %v380 = vld [vmem:[%s2] sm:$0xff]
      %v381 = vld [vmem:[%s2 + $0x8] sm:$0xff]
      %v382 = vld [vmem:[%s2 + $0x10] sm:$0xff]
      %v383 = vld [vmem:[%s2 + $0x18] sm:$0xff]
      %v384 = vld [vmem:[%s2 + $0x20] sm:$0xff]
      %v385 = vld [vmem:[%s2 + $0x28] sm:$0xff]
      %v386 = vld [vmem:[%s2 + $0x30] sm:$0xff]
      %v387 = vld [vmem:[%s2 + $0x38] sm:$0xff]
      %v388 = vld [vmem:[%s2 + $0x40] sm:$0xff]
      %v389 = vld [vmem:[%s2 + $0x48] sm:$0xff]
      %v390 = vld [vmem:[%s2 + $0x50] sm:$0xff]
      %v391 = vld [vmem:[%s2 + $0x58] sm:$0xff]
      %v392 = vld [vmem:[%s2 + $0x60] sm:$0xff]
      %v393 = vld [vmem:[%s2 + $0x68] sm:$0xff]
      %v394 = vld [vmem:[%s2 + $0x70] sm:$0xff]
      %v395 = vld [vmem:[%s2 + $0x78] sm:$0xff]
      %vm396 = vcmask 523264
      %v398 = vsel %vm396, %v379, 0
      %400 = vmatprep.subr.mxu0 0.0
      %401 = vmatpush1.msra.mxu0 0.0
      %402 = vmatprep.subr.mxu0 0.0
      %403 = vmatpush1.msra.mxu0 0.0
      %404 = vmatprep.subr.mxu0 0.0
      %405 = vmatpush1.msra.mxu0 0.0
      %406 = vmatprep.subr.mxu0 0.0
      %407 = vmatpush1.msra.mxu0 0.0
      %408 = vmatprep.subr.mxu0 0.0
      %409 = vmatpush1.msra.mxu0 0.0
      %410 = vmatprep.subr.mxu0 0.0
      %411 = vmatpush1.msra.mxu0 0.0
      %412 = vmatprep.subr.mxu0 0.0
      %413 = vmatpush1.msra.mxu0 0.0
      %414 = vmatprep.subr.mxu0 0.0
      %415 = vmatpush1.msra.mxu0 0.0
      %416 = vmatprep.subr.mxu0 %v395
      %417 = vmatpush1.msra.mxu0 %v394
      %418 = vmatprep.subr.mxu0 %v393
      %419 = vmatpush1.msra.mxu0 %v392
      %420 = vmatprep.subr.mxu0 %v391
      %421 = vmatpush1.msra.mxu0 %v390
      %422 = vmatprep.subr.mxu0 %v389
      %423 = vmatpush1.msra.mxu0 %v388
      %424 = vmatprep.subr.mxu0 %v387
      %425 = vmatpush1.msra.mxu0 %v386
      %426 = vmatprep.subr.mxu0 %v385
      %427 = vmatpush1.msra.mxu0 %v384
      %428 = vmatprep.subr.mxu0 %v383
      %429 = vmatpush1.msra.mxu0 %v382
      %430 = vmatprep.subr.mxu0 %v381
      %431 = vmatpush1.msra.mxu0 %v380
      %432 = vmatprep.subr.mxu0 0.0
      %433 = vmatpush2.msra.mxu0 0.0
      %434 = vmatprep.subr.mxu0 0.0
      %435 = vmatpush2.msra.mxu0 0.0
      %436 = vmatprep.subr.mxu0 0.0
      %437 = vmatpush2.msra.mxu0 0.0
      %438 = vmatprep.subr.mxu0 0.0
      %439 = vmatpush2.msra.mxu0 0.0
      %440 = vmatprep.subr.mxu0 0.0
      %441 = vmatpush2.msra.mxu0 0.0
      %442 = vmatprep.subr.mxu0 0.0
      %443 = vmatpush2.msra.mxu0 0.0
      %444 = vmatprep.subr.mxu0 0.0
      %445 = vmatpush2.msra.mxu0 0.0
      %446 = vmatprep.subr.mxu0 0.0
      %447 = vmatpush2.msra.mxu0 0.0
      %448 = vmatprep.subr.mxu0 0.0
      %449 = vmatpush2.msra.mxu0 0.0
      %450 = vmatprep.subr.mxu0 0.0
      %451 = vmatpush2.msra.mxu0 0.0
      %452 = vmatprep.subr.mxu0 0.0
      %453 = vmatpush2.msra.mxu0 0.0
      %454 = vmatprep.subr.mxu0 0.0
      %455 = vmatpush2.msra.mxu0 0.0
      %456 = vmatprep.subr.mxu0 0.0
      %457 = vmatpush2.msra.mxu0 0.0
      %458 = vmatprep.subr.mxu0 0.0
      %459 = vmatpush2.msra.mxu0 0.0
      %460 = vmatprep.subr.mxu0 0.0
      %461 = vmatpush2.msra.mxu0 0.0
      %462 = vmatprep.subr.mxu0 0.0
      %463 = vmatpush2.msra.mxu0 0.0
      %464 = vmatprep.mubr.f32.mxu0 0.0
      %465 = vmatmul.mubr.f32.gmra.mxu0 %v398
      %v466 = vpop.f32.mrf.mxu0
      %v467 = vadd.f32 0.0, %v466
      %v468 = vpop.f32.mrf.mxu0
      %v469 = vadd.f32 0.0, %v468
      %470 = vdwg.mxu0
      %s471 = scalar_lea.vmem %s2, 128
      %v472 = vld [vmem:[%s471] sm:$0xff]
      %v473 = vld [vmem:[%s471 + $0x8] sm:$0xff]
      %v474 = vld [vmem:[%s471 + $0x10] sm:$0xff]
      %v475 = vld [vmem:[%s471 + $0x18] sm:$0xff]
      %v476 = vld [vmem:[%s471 + $0x20] sm:$0xff]
      %v477 = vld [vmem:[%s471 + $0x28] sm:$0xff]
      %v478 = vld [vmem:[%s471 + $0x30] sm:$0xff]
      %v479 = vld [vmem:[%s471 + $0x38] sm:$0xff]
      %v480 = vld [vmem:[%s471 + $0x40] sm:$0xff]
      %v481 = vld [vmem:[%s471 + $0x48] sm:$0xff]
      %v482 = vld [vmem:[%s471 + $0x50] sm:$0xff]
      %v483 = vld [vmem:[%s471 + $0x58] sm:$0xff]
      %v484 = vld [vmem:[%s471 + $0x60] sm:$0xff]
      %v485 = vld [vmem:[%s471 + $0x68] sm:$0xff]
      %v486 = vld [vmem:[%s471 + $0x70] sm:$0xff]
      %v487 = vld [vmem:[%s471 + $0x78] sm:$0xff]
      %488 = vmatprep.subr.mxu0 0.0
      %489 = vmatpush1.msra.mxu0 0.0
      %490 = vmatprep.subr.mxu0 0.0
      %491 = vmatpush1.msra.mxu0 0.0
      %492 = vmatprep.subr.mxu0 0.0
      %493 = vmatpush1.msra.mxu0 0.0
      %494 = vmatprep.subr.mxu0 0.0
      %495 = vmatpush1.msra.mxu0 0.0
      %496 = vmatprep.subr.mxu0 0.0
      %497 = vmatpush1.msra.mxu0 0.0
      %498 = vmatprep.subr.mxu0 0.0
      %499 = vmatpush1.msra.mxu0 0.0
      %500 = vmatprep.subr.mxu0 0.0
      %501 = vmatpush1.msra.mxu0 0.0
      %502 = vmatprep.subr.mxu0 0.0
      %503 = vmatpush1.msra.mxu0 0.0
      %504 = vmatprep.subr.mxu0 %v487
      %505 = vmatpush1.msra.mxu0 %v486
      %506 = vmatprep.subr.mxu0 %v485
      %507 = vmatpush1.msra.mxu0 %v484
      %508 = vmatprep.subr.mxu0 %v483
      %509 = vmatpush1.msra.mxu0 %v482
      %510 = vmatprep.subr.mxu0 %v481
      %511 = vmatpush1.msra.mxu0 %v480
      %512 = vmatprep.subr.mxu0 %v479
      %513 = vmatpush1.msra.mxu0 %v478
      %514 = vmatprep.subr.mxu0 %v477
      %515 = vmatpush1.msra.mxu0 %v476
      %516 = vmatprep.subr.mxu0 %v475
      %517 = vmatpush1.msra.mxu0 %v474
      %518 = vmatprep.subr.mxu0 %v473
      %519 = vmatpush1.msra.mxu0 %v472
      %520 = vmatprep.subr.mxu0 0.0
      %521 = vmatpush2.msra.mxu0 0.0
      %522 = vmatprep.subr.mxu0 0.0
      %523 = vmatpush2.msra.mxu0 0.0
      %524 = vmatprep.subr.mxu0 0.0
      %525 = vmatpush2.msra.mxu0 0.0
      %526 = vmatprep.subr.mxu0 0.0
      %527 = vmatpush2.msra.mxu0 0.0
      %528 = vmatprep.subr.mxu0 0.0
      %529 = vmatpush2.msra.mxu0 0.0
      %530 = vmatprep.subr.mxu0 0.0
      %531 = vmatpush2.msra.mxu0 0.0
      %532 = vmatprep.subr.mxu0 0.0
      %533 = vmatpush2.msra.mxu0 0.0
      %534 = vmatprep.subr.mxu0 0.0
      %535 = vmatpush2.msra.mxu0 0.0
      %536 = vmatprep.subr.mxu0 0.0
      %537 = vmatpush2.msra.mxu0 0.0
      %538 = vmatprep.subr.mxu0 0.0
      %539 = vmatpush2.msra.mxu0 0.0
      %540 = vmatprep.subr.mxu0 0.0
      %541 = vmatpush2.msra.mxu0 0.0
      %542 = vmatprep.subr.mxu0 0.0
      %543 = vmatpush2.msra.mxu0 0.0
      %544 = vmatprep.subr.mxu0 0.0
      %545 = vmatpush2.msra.mxu0 0.0
      %546 = vmatprep.subr.mxu0 0.0
      %547 = vmatpush2.msra.mxu0 0.0
      %548 = vmatprep.subr.mxu0 0.0
      %549 = vmatpush2.msra.mxu0 0.0
      %550 = vmatprep.subr.mxu0 0.0
      %551 = vmatpush2.msra.mxu0 0.0
      %552 = vmatprep.mubr.f32.mxu0 0.0
      %553 = vmatmul.mubr.f32.gmra.mxu0 %v398
      %v554 = vpop.f32.mrf.mxu0
      %v555 = vadd.f32 0.0, %v554
      %v556 = vpop.f32.mrf.mxu0
      %v557 = vadd.f32 0.0, %v556
      %558 = vdwg.mxu0
      %s559 = scalar_lea.vmem %s2, 256
      %v560 = vld [vmem:[%s559] sm:$0xff]
      %v561 = vld [vmem:[%s559 + $0x8] sm:$0xff]
      %v562 = vld [vmem:[%s559 + $0x10] sm:$0xff]
      %v563 = vld [vmem:[%s559 + $0x18] sm:$0xff]
      %v564 = vld [vmem:[%s559 + $0x20] sm:$0xff]
      %v565 = vld [vmem:[%s559 + $0x28] sm:$0xff]
      %v566 = vld [vmem:[%s559 + $0x30] sm:$0xff]
      %v567 = vld [vmem:[%s559 + $0x38] sm:$0xff]
      %v568 = vld [vmem:[%s559 + $0x40] sm:$0xff]
      %v569 = vld [vmem:[%s559 + $0x48] sm:$0xff]
      %v570 = vld [vmem:[%s559 + $0x50] sm:$0xff]
      %v571 = vld [vmem:[%s559 + $0x58] sm:$0xff]
      %v572 = vld [vmem:[%s559 + $0x60] sm:$0xff]
      %v573 = vld [vmem:[%s559 + $0x68] sm:$0xff]
      %v574 = vld [vmem:[%s559 + $0x70] sm:$0xff]
      %v575 = vld [vmem:[%s559 + $0x78] sm:$0xff]
      %576 = vmatprep.subr.mxu0 0.0
      %577 = vmatpush1.msra.mxu0 0.0
      %578 = vmatprep.subr.mxu0 0.0
      %579 = vmatpush1.msra.mxu0 0.0
      %580 = vmatprep.subr.mxu0 0.0
      %581 = vmatpush1.msra.mxu0 0.0
      %582 = vmatprep.subr.mxu0 0.0
      %583 = vmatpush1.msra.mxu0 0.0
      %584 = vmatprep.subr.mxu0 0.0
      %585 = vmatpush1.msra.mxu0 0.0
      %586 = vmatprep.subr.mxu0 0.0
      %587 = vmatpush1.msra.mxu0 0.0
      %588 = vmatprep.subr.mxu0 0.0
      %589 = vmatpush1.msra.mxu0 0.0
      %590 = vmatprep.subr.mxu0 0.0
      %591 = vmatpush1.msra.mxu0 0.0
      %592 = vmatprep.subr.mxu0 %v575
      %593 = vmatpush1.msra.mxu0 %v574
      %594 = vmatprep.subr.mxu0 %v573
      %595 = vmatpush1.msra.mxu0 %v572
      %596 = vmatprep.subr.mxu0 %v571
      %597 = vmatpush1.msra.mxu0 %v570
      %598 = vmatprep.subr.mxu0 %v569
      %599 = vmatpush1.msra.mxu0 %v568
      %600 = vmatprep.subr.mxu0 %v567
      %601 = vmatpush1.msra.mxu0 %v566
      %602 = vmatprep.subr.mxu0 %v565
      %603 = vmatpush1.msra.mxu0 %v564
      %604 = vmatprep.subr.mxu0 %v563
      %605 = vmatpush1.msra.mxu0 %v562
      %606 = vmatprep.subr.mxu0 %v561
      %607 = vmatpush1.msra.mxu0 %v560
      %608 = vmatprep.subr.mxu0 0.0
      %609 = vmatpush2.msra.mxu0 0.0
      %610 = vmatprep.subr.mxu0 0.0
      %611 = vmatpush2.msra.mxu0 0.0
      %612 = vmatprep.subr.mxu0 0.0
      %613 = vmatpush2.msra.mxu0 0.0
      %614 = vmatprep.subr.mxu0 0.0
      %615 = vmatpush2.msra.mxu0 0.0
      %616 = vmatprep.subr.mxu0 0.0
      %617 = vmatpush2.msra.mxu0 0.0
      %618 = vmatprep.subr.mxu0 0.0
      %619 = vmatpush2.msra.mxu0 0.0
      %620 = vmatprep.subr.mxu0 0.0
      %621 = vmatpush2.msra.mxu0 0.0
      %622 = vmatprep.subr.mxu0 0.0
      %623 = vmatpush2.msra.mxu0 0.0
      %624 = vmatprep.subr.mxu0 0.0
      %625 = vmatpush2.msra.mxu0 0.0
      %626 = vmatprep.subr.mxu0 0.0
      %627 = vmatpush2.msra.mxu0 0.0
      %628 = vmatprep.subr.mxu0 0.0
      %629 = vmatpush2.msra.mxu0 0.0
      %630 = vmatprep.subr.mxu0 0.0
      %631 = vmatpush2.msra.mxu0 0.0
      %632 = vmatprep.subr.mxu0 0.0
      %633 = vmatpush2.msra.mxu0 0.0
      %634 = vmatprep.subr.mxu0 0.0
      %635 = vmatpush2.msra.mxu0 0.0
      %636 = vmatprep.subr.mxu0 0.0
      %637 = vmatpush2.msra.mxu0 0.0
      %638 = vmatprep.subr.mxu0 0.0
      %639 = vmatpush2.msra.mxu0 0.0
      %640 = vmatprep.mubr.f32.mxu0 0.0
      %641 = vmatmul.mubr.f32.gmra.mxu0 %v398
      %v642 = vpop.f32.mrf.mxu0
      %v643 = vadd.f32 0.0, %v642
      %v644 = vpop.f32.mrf.mxu0
      %v645 = vadd.f32 0.0, %v644
      %646 = vdwg.mxu0
      %s647 = scalar_lea.vmem %s2, 384
      %v648 = vld [vmem:[%s647] sm:$0xff]
      %v649 = vld [vmem:[%s647 + $0x8] sm:$0xff]
      %v650 = vld [vmem:[%s647 + $0x10] sm:$0xff]
      %v651 = vld [vmem:[%s647 + $0x18] sm:$0xff]
      %v652 = vld [vmem:[%s647 + $0x20] sm:$0xff]
      %v653 = vld [vmem:[%s647 + $0x28] sm:$0xff]
      %v654 = vld [vmem:[%s647 + $0x30] sm:$0xff]
      %v655 = vld [vmem:[%s647 + $0x38] sm:$0xff]
      %v656 = vld [vmem:[%s647 + $0x40] sm:$0xff]
      %v657 = vld [vmem:[%s647 + $0x48] sm:$0xff]
      %v658 = vld [vmem:[%s647 + $0x50] sm:$0xff]
      %v659 = vld [vmem:[%s647 + $0x58] sm:$0xff]
      %v660 = vld [vmem:[%s647 + $0x60] sm:$0xff]
      %v661 = vld [vmem:[%s647 + $0x68] sm:$0xff]
      %v662 = vld [vmem:[%s647 + $0x70] sm:$0xff]
      %v663 = vld [vmem:[%s647 + $0x78] sm:$0xff]
      %664 = vmatprep.subr.mxu0 0.0
      %665 = vmatpush1.msra.mxu0 0.0
      %666 = vmatprep.subr.mxu0 0.0
      %667 = vmatpush1.msra.mxu0 0.0
      %668 = vmatprep.subr.mxu0 0.0
      %669 = vmatpush1.msra.mxu0 0.0
      %670 = vmatprep.subr.mxu0 0.0
      %671 = vmatpush1.msra.mxu0 0.0
      %672 = vmatprep.subr.mxu0 0.0
      %673 = vmatpush1.msra.mxu0 0.0
      %674 = vmatprep.subr.mxu0 0.0
      %675 = vmatpush1.msra.mxu0 0.0
      %676 = vmatprep.subr.mxu0 0.0
      %677 = vmatpush1.msra.mxu0 0.0
      %678 = vmatprep.subr.mxu0 0.0
      %679 = vmatpush1.msra.mxu0 0.0
      %680 = vmatprep.subr.mxu0 %v663
      %681 = vmatpush1.msra.mxu0 %v662
      %682 = vmatprep.subr.mxu0 %v661
      %683 = vmatpush1.msra.mxu0 %v660
      %684 = vmatprep.subr.mxu0 %v659
      %685 = vmatpush1.msra.mxu0 %v658
      %686 = vmatprep.subr.mxu0 %v657
      %687 = vmatpush1.msra.mxu0 %v656
      %688 = vmatprep.subr.mxu0 %v655
      %689 = vmatpush1.msra.mxu0 %v654
      %690 = vmatprep.subr.mxu0 %v653
      %691 = vmatpush1.msra.mxu0 %v652
      %692 = vmatprep.subr.mxu0 %v651
      %693 = vmatpush1.msra.mxu0 %v650
      %694 = vmatprep.subr.mxu0 %v649
      %695 = vmatpush1.msra.mxu0 %v648
      %696 = vmatprep.subr.mxu0 0.0
      %697 = vmatpush2.msra.mxu0 0.0
      %698 = vmatprep.subr.mxu0 0.0
      %699 = vmatpush2.msra.mxu0 0.0
      %700 = vmatprep.subr.mxu0 0.0
      %701 = vmatpush2.msra.mxu0 0.0
      %702 = vmatprep.subr.mxu0 0.0
      %703 = vmatpush2.msra.mxu0 0.0
      %704 = vmatprep.subr.mxu0 0.0
      %705 = vmatpush2.msra.mxu0 0.0
      %706 = vmatprep.subr.mxu0 0.0
      %707 = vmatpush2.msra.mxu0 0.0
      %708 = vmatprep.subr.mxu0 0.0
      %709 = vmatpush2.msra.mxu0 0.0
      %710 = vmatprep.subr.mxu0 0.0
      %711 = vmatpush2.msra.mxu0 0.0
      %712 = vmatprep.subr.mxu0 0.0
      %713 = vmatpush2.msra.mxu0 0.0
      %714 = vmatprep.subr.mxu0 0.0
      %715 = vmatpush2.msra.mxu0 0.0
      %716 = vmatprep.subr.mxu0 0.0
      %717 = vmatpush2.msra.mxu0 0.0
      %718 = vmatprep.subr.mxu0 0.0
      %719 = vmatpush2.msra.mxu0 0.0
      %720 = vmatprep.subr.mxu0 0.0
      %721 = vmatpush2.msra.mxu0 0.0
      %722 = vmatprep.subr.mxu0 0.0
      %723 = vmatpush2.msra.mxu0 0.0
      %724 = vmatprep.subr.mxu0 0.0
      %725 = vmatpush2.msra.mxu0 0.0
      %726 = vmatprep.subr.mxu0 0.0
      %727 = vmatpush2.msra.mxu0 0.0
      %728 = vmatprep.mubr.f32.mxu0 0.0
      %729 = vmatmul.mubr.f32.gmra.mxu0 %v398
      %v730 = vpop.f32.mrf.mxu0
      %v731 = vadd.f32 0.0, %v730
      %v732 = vpop.f32.mrf.mxu0
      %v733 = vadd.f32 0.0, %v732
      %734 = vdwg.mxu0
      %v735 = vld [vmem:[%s3] sm:$0xff]
      %v736 = vld [vmem:[%s4] sm:$0xff]
      %v737 = vld [vmem:[%s4 + $0x8] sm:$0xff]
      %vm738 = vcmask 261120
      %v740 = vsel %vm738, %v735, 0
      %742 = vmatprep.subr.mxu0 0.0
      %743 = vmatpush1.msra.mxu0 0.0
      %744 = vmatprep.subr.mxu0 0.0
      %745 = vmatpush1.msra.mxu0 0.0
      %746 = vmatprep.subr.mxu0 0.0
      %747 = vmatpush1.msra.mxu0 0.0
      %748 = vmatprep.subr.mxu0 0.0
      %749 = vmatpush1.msra.mxu0 0.0
      %750 = vmatprep.subr.mxu0 0.0
      %751 = vmatpush1.msra.mxu0 0.0
      %752 = vmatprep.subr.mxu0 0.0
      %753 = vmatpush1.msra.mxu0 0.0
      %754 = vmatprep.subr.mxu0 0.0
      %755 = vmatpush1.msra.mxu0 0.0
      %756 = vmatprep.subr.mxu0 0.0
      %757 = vmatpush1.msra.mxu0 0.0
      %758 = vmatprep.subr.mxu0 0.0
      %759 = vmatpush1.msra.mxu0 0.0
      %760 = vmatprep.subr.mxu0 0.0
      %761 = vmatpush1.msra.mxu0 0.0
      %762 = vmatprep.subr.mxu0 0.0
      %763 = vmatpush1.msra.mxu0 0.0
      %764 = vmatprep.subr.mxu0 0.0
      %765 = vmatpush1.msra.mxu0 0.0
      %766 = vmatprep.subr.mxu0 %v733
      %767 = vmatpush1.msra.mxu0 %v731
      %768 = vmatprep.subr.mxu0 %v645
      %769 = vmatpush1.msra.mxu0 %v643
      %770 = vmatprep.subr.mxu0 %v557
      %771 = vmatpush1.msra.mxu0 %v555
      %772 = vmatprep.subr.mxu0 %v469
      %773 = vmatpush1.msra.mxu0 %v467
      %774 = vmatprep.subr.mxu0 0.0
      %775 = vmatpush2.msra.mxu0 0.0
      %776 = vmatprep.subr.mxu0 0.0
      %777 = vmatpush2.msra.mxu0 0.0
      %778 = vmatprep.subr.mxu0 0.0
      %779 = vmatpush2.msra.mxu0 0.0
      %780 = vmatprep.subr.mxu0 0.0
      %781 = vmatpush2.msra.mxu0 0.0
      %782 = vmatprep.subr.mxu0 0.0
      %783 = vmatpush2.msra.mxu0 0.0
      %784 = vmatprep.subr.mxu0 0.0
      %785 = vmatpush2.msra.mxu0 0.0
      %786 = vmatprep.subr.mxu0 0.0
      %787 = vmatpush2.msra.mxu0 0.0
      %788 = vmatprep.subr.mxu0 0.0
      %789 = vmatpush2.msra.mxu0 0.0
      %790 = vmatprep.subr.mxu0 0.0
      %791 = vmatpush2.msra.mxu0 0.0
      %792 = vmatprep.subr.mxu0 0.0
      %793 = vmatpush2.msra.mxu0 0.0
      %794 = vmatprep.subr.mxu0 0.0
      %795 = vmatpush2.msra.mxu0 0.0
      %796 = vmatprep.subr.mxu0 0.0
      %797 = vmatpush2.msra.mxu0 0.0
      %798 = vmatprep.subr.mxu0 0.0
      %799 = vmatpush2.msra.mxu0 0.0
      %800 = vmatprep.subr.mxu0 0.0
      %801 = vmatpush2.msra.mxu0 0.0
      %802 = vmatprep.subr.mxu0 0.0
      %803 = vmatpush2.msra.mxu0 0.0
      %804 = vmatprep.subr.mxu0 0.0
      %805 = vmatpush2.msra.mxu0 0.0
      %806 = vmatprep.mubr.f32.mxu0 0.0
      %807 = vmatmul.mubr.f32.gmra.mxu0 %v740
      %v808 = vpop.f32.mrf.mxu0
      %v809 = vadd.f32 %v736, %v808
      %v810 = vpop.f32.mrf.mxu0
      %v811 = vadd.f32 %v737, %v810
      %812 = vdwg.mxu0
      %v813 = vld [vmem:[%s5] sm:$0xff]
      %v814 = vld [vmem:[%s5 + $0x8] sm:$0xff]
      %v815 = vld [vmem:[%s6] sm:$0xff]
      %816 = vst [vmem:[#allocation2] sm:$0xff] 0.0
      %817 = vst [vmem:[#allocation2 + $0x8] sm:$0xff] 0.0
      %vm818 = vcmask 277504
      %819 = vst.msk [vmem:[#allocation2 + $0x10] sm:$0xff] %vm818, 0.0
      %820 = vst [vmem:[#allocation2 + $0x18] sm:$0xff] 0.0
      %821 = vst [vmem:[#allocation2 + $0x20] sm:$0xff] 0.0
      %822 = vst.msk [vmem:[#allocation2 + $0x28] sm:$0xff] %vm818, 0.0
      %827 = vrot.lane.b32.xlu0 %v377, 17
      %v828 = vpop.permute.xlu0 %827
      %829 = vrot.lane.b32.xlu0 %v378, 17
      %v830 = vpop.permute.xlu0 %829
      %831 = vrot.lane.b32.xlu0 %v809, 17
      %v832 = vpop.permute.xlu0 %831
      %833 = vrot.lane.b32.xlu0 %v811, 17
      %v834 = vpop.permute.xlu0 %833
      %vm835 = vcmask 138240
      %v836 = vsel %vm835, %v828, %v830
      %v837 = vsel %vm835, %v832, %v834
      %vm844 = vcmask 1047688
      %845 = vst.msk [vmem:[#allocation2] sm:$0xff] %vm844, %v828
      %846 = vst [vmem:[#allocation2 + $0x8] sm:$0xff] %v836
      %847 = vst.msk [vmem:[#allocation2 + $0x10] sm:$0xff] %vm835, %v830
      %848 = vst.msk [vmem:[#allocation2 + $0x18] sm:$0xff] %vm844, %v832
      %849 = vst [vmem:[#allocation2 + $0x20] sm:$0xff] %v837
      %850 = vst.msk [vmem:[#allocation2 + $0x28] sm:$0xff] %vm835, %v834
      %v851 = vld [vmem:[#allocation2] sm:$0xff]
      %v852 = vld [vmem:[#allocation2 + $0x8] sm:$0xff]
      %v853 = vld [vmem:[#allocation2 + $0x18] sm:$0xff]
      %v854 = vld [vmem:[#allocation2 + $0x20] sm:$0xff]
      %v855 = vld [vmem:[%s9] sm:$0x3]
      %v857 = vlaneseq
      %v858 = vshrl.u32 %v857, 7
      %v859 = vsub.s32 0, %v858
      %v860 = vrot.slane %v855, %v859
      %v861 = vlaneseq
      %v862 = vshrl.u32 %v861, 7
      %v863 = vsub.s32 1, %v862
      %v864 = vrot.slane %v855, %v863
      %v867 = vmul.f32 %v851, %v860
      %v868 = vmul.f32 %v852, %v864
      %v869 = vmul.f32 %v853, %v860
      %v870 = vmul.f32 %v854, %v864
      %v871 = vld [vmem:[#allocation2 + $0x10] sm:$0xff]
      %v872 = vld [vmem:[#allocation2 + $0x28] sm:$0xff]
      %s873 = scalar_lea.vmem %s9, 2
      %v874 = vld [vmem:[%s873] sm:$0x3]
      %v876 = vlaneseq
      %v877 = vshrl.u32 %v876, 7
      %v878 = vsub.s32 0, %v877
      %v879 = vrot.slane %v874, %v878
      %v880 = vlaneseq
      %v881 = vshrl.u32 %v880, 7
      %v882 = vsub.s32 1, %v881
      %v883 = vrot.slane %v874, %v882
      %884 = vrot.lane.b32.xlu0 %v879, 2
      %v885 = vpop.permute.xlu0 %884
      %886 = vrot.lane.b32.xlu0 %v883, 2
      %v887 = vpop.permute.xlu0 %886
      %vm888 = vcmask 15360
      %v889 = vsel %vm888, %v885, %v887
      %v893 = vmul.f32 %v851, %v885
      %v894 = vmul.f32 %v852, %v889
      %v895 = vmul.f32 %v871, %v887
      %v896 = vmul.f32 %v853, %v885
      %v897 = vmul.f32 %v854, %v889
      %v898 = vmul.f32 %v872, %v887
      %899 = vrot.lane.b32.xlu0 %v860, 16
      %v900 = vpop.permute.xlu0 %899
      %901 = vrot.lane.b32.xlu0 %v864, 16
      %v902 = vpop.permute.xlu0 %901
      %vm903 = vcmask 130048
      %v904 = vsel %vm903, %v900, %v902
      %v908 = vmul.f32 %v851, %v900
      %v909 = vmul.f32 %v852, %v904
      %v910 = vmul.f32 %v871, %v902
      %v911 = vmul.f32 %v853, %v900
      %v912 = vmul.f32 %v854, %v904
      %v913 = vmul.f32 %v872, %v902
      %914 = vrot.lane.b32.xlu0 %v879, 18
      %v915 = vpop.permute.xlu0 %914
      %916 = vrot.lane.b32.xlu0 %v883, 18
      %v917 = vpop.permute.xlu0 %916
      %vm918 = vcmask 146432
      %v919 = vsel %vm918, %v915, %v917
      %v923 = vmul.f32 %v851, %v915
      %v924 = vmul.f32 %v852, %v919
      %v925 = vmul.f32 %v871, %v917
      %v926 = vmul.f32 %v853, %v915
      %v927 = vmul.f32 %v854, %v919
      %v928 = vmul.f32 %v872, %v917
      %929 = vrot.lane.b32.xlu0 %v860, 32
      %v930 = vpop.permute.xlu0 %929
      %931 = vrot.lane.b32.xlu0 %v864, 32
      %v932 = vpop.permute.xlu0 %931
      %v933 = vsel %vm738, %v930, %v932
      %v937 = vmul.f32 %v851, %v930
      %v938 = vmul.f32 %v852, %v933
      %v939 = vmul.f32 %v871, %v932
      %v940 = vmul.f32 %v853, %v930
      %v941 = vmul.f32 %v854, %v933
      %v942 = vmul.f32 %v872, %v932
      %943 = vrot.lane.b32.xlu0 %v879, 34
      %v944 = vpop.permute.xlu0 %943
      %945 = vrot.lane.b32.xlu0 %v883, 34
      %v946 = vpop.permute.xlu0 %945
      %v947 = vsel %vm818, %v944, %v946
      %v951 = vmul.f32 %v851, %v944
      %v952 = vmul.f32 %v852, %v947
      %v953 = vmul.f32 %v871, %v946
      %v954 = vmul.f32 %v853, %v944
      %v955 = vmul.f32 %v854, %v947
      %v956 = vmul.f32 %v872, %v946
      %963 = vrot.lane.b32.xlu0 %v851, 127
      %v964 = vpop.permute.xlu0 %963
      %965 = vrot.lane.b32.xlu0 %v852, 127
      %v966 = vpop.permute.xlu0 %965
      %967 = vrot.lane.b32.xlu0 %v871, 127
      %v968 = vpop.permute.xlu0 %967
      %969 = vrot.lane.b32.xlu0 %v853, 127
      %v970 = vpop.permute.xlu0 %969
      %971 = vrot.lane.b32.xlu0 %v854, 127
      %v972 = vpop.permute.xlu0 %971
      %973 = vrot.lane.b32.xlu0 %v872, 127
      %v974 = vpop.permute.xlu0 %973
      %vm975 = vcmask 1039360
      %v976 = vsel %vm975, %v964, %v966
      %v977 = vsel %vm975, %v966, %v968
      %v978 = vsel %vm975, %v970, %v972
      %v979 = vsel %vm975, %v972, %v974
      %990 = vrot.lane.b32.xlu0 %v893, 126
      %v991 = vpop.permute.xlu0 %990
      %992 = vrot.lane.b32.xlu0 %v894, 126
      %v993 = vpop.permute.xlu0 %992
      %994 = vrot.lane.b32.xlu0 %v895, 126
      %v995 = vpop.permute.xlu0 %994
      %996 = vrot.lane.b32.xlu0 %v896, 126
      %v997 = vpop.permute.xlu0 %996
      %998 = vrot.lane.b32.xlu0 %v897, 126
      %v999 = vpop.permute.xlu0 %998
      %1000 = vrot.lane.b32.xlu0 %v898, 126
      %v1001 = vpop.permute.xlu0 %1000
      %vm1002 = vcmask 1031168
      %v1003 = vsel %vm1002, %v991, %v993
      %v1004 = vsel %vm1002, %v993, %v995
      %v1005 = vsel %vm1002, %v997, %v999
      %v1006 = vsel %vm1002, %v999, %v1001
      %1017 = vrot.lane.b32.xlu0 %v908, 112
      %v1018 = vpop.permute.xlu0 %1017
      %1019 = vrot.lane.b32.xlu0 %v909, 112
      %v1020 = vpop.permute.xlu0 %1019
      %1021 = vrot.lane.b32.xlu0 %v910, 112
      %v1022 = vpop.permute.xlu0 %1021
      %1023 = vrot.lane.b32.xlu0 %v911, 112
      %v1024 = vpop.permute.xlu0 %1023
      %1025 = vrot.lane.b32.xlu0 %v912, 112
      %v1026 = vpop.permute.xlu0 %1025
      %1027 = vrot.lane.b32.xlu0 %v913, 112
      %v1028 = vpop.permute.xlu0 %1027
      %vm1029 = vcmask 916480
      %v1030 = vsel %vm1029, %v1018, %v1020
      %v1031 = vsel %vm1029, %v1020, %v1022
      %v1032 = vsel %vm1029, %v1024, %v1026
      %v1033 = vsel %vm1029, %v1026, %v1028
      %1038 = vrot.lane.b32.xlu0 %v851, 111
      %v1039 = vpop.permute.xlu0 %1038
      %1040 = vrot.lane.b32.xlu0 %v852, 111
      %v1041 = vpop.permute.xlu0 %1040
      %1042 = vrot.lane.b32.xlu0 %v871, 111
      %v1043 = vpop.permute.xlu0 %1042
      %1044 = vrot.lane.b32.xlu0 %v853, 111
      %v1045 = vpop.permute.xlu0 %1044
      %1046 = vrot.lane.b32.xlu0 %v854, 111
      %v1047 = vpop.permute.xlu0 %1046
      %1048 = vrot.lane.b32.xlu0 %v872, 111
      %v1049 = vpop.permute.xlu0 %1048
      %vm1050 = vcmask 908288
      %v1051 = vsel %vm1050, %v1039, %v1041
      %v1052 = vsel %vm1050, %v1041, %v1043
      %v1053 = vsel %vm1050, %v1045, %v1047
      %v1054 = vsel %vm1050, %v1047, %v1049
      %1065 = vrot.lane.b32.xlu0 %v923, 110
      %v1066 = vpop.permute.xlu0 %1065
      %1067 = vrot.lane.b32.xlu0 %v924, 110
      %v1068 = vpop.permute.xlu0 %1067
      %1069 = vrot.lane.b32.xlu0 %v925, 110
      %v1070 = vpop.permute.xlu0 %1069
      %1071 = vrot.lane.b32.xlu0 %v926, 110
      %v1072 = vpop.permute.xlu0 %1071
      %1073 = vrot.lane.b32.xlu0 %v927, 110
      %v1074 = vpop.permute.xlu0 %1073
      %1075 = vrot.lane.b32.xlu0 %v928, 110
      %v1076 = vpop.permute.xlu0 %1075
      %vm1077 = vcmask 900096
      %v1078 = vsel %vm1077, %v1066, %v1068
      %v1079 = vsel %vm1077, %v1068, %v1070
      %v1080 = vsel %vm1077, %v1072, %v1074
      %v1081 = vsel %vm1077, %v1074, %v1076
      %1092 = vrot.lane.b32.xlu0 %v937, 96
      %v1093 = vpop.permute.xlu0 %1092
      %1094 = vrot.lane.b32.xlu0 %v938, 96
      %v1095 = vpop.permute.xlu0 %1094
      %1096 = vrot.lane.b32.xlu0 %v939, 96
      %v1097 = vpop.permute.xlu0 %1096
      %1098 = vrot.lane.b32.xlu0 %v940, 96
      %v1099 = vpop.permute.xlu0 %1098
      %1100 = vrot.lane.b32.xlu0 %v941, 96
      %v1101 = vpop.permute.xlu0 %1100
      %1102 = vrot.lane.b32.xlu0 %v942, 96
      %v1103 = vpop.permute.xlu0 %1102
      %vm1104 = vcmask 785408
      %v1105 = vsel %vm1104, %v1093, %v1095
      %v1106 = vsel %vm1104, %v1095, %v1097
      %v1107 = vsel %vm1104, %v1099, %v1101
      %v1108 = vsel %vm1104, %v1101, %v1103
      %1113 = vrot.lane.b32.xlu0 %v851, 95
      %v1114 = vpop.permute.xlu0 %1113
      %1115 = vrot.lane.b32.xlu0 %v852, 95
      %v1116 = vpop.permute.xlu0 %1115
      %1117 = vrot.lane.b32.xlu0 %v871, 95
      %v1118 = vpop.permute.xlu0 %1117
      %1119 = vrot.lane.b32.xlu0 %v853, 95
      %v1120 = vpop.permute.xlu0 %1119
      %1121 = vrot.lane.b32.xlu0 %v854, 95
      %v1122 = vpop.permute.xlu0 %1121
      %1123 = vrot.lane.b32.xlu0 %v872, 95
      %v1124 = vpop.permute.xlu0 %1123
      %vm1125 = vcmask 777216
      %v1126 = vsel %vm1125, %v1114, %v1116
      %v1127 = vsel %vm1125, %v1116, %v1118
      %v1128 = vsel %vm1125, %v1120, %v1122
      %v1129 = vsel %vm1125, %v1122, %v1124
      %1140 = vrot.lane.b32.xlu0 %v951, 94
      %v1141 = vpop.permute.xlu0 %1140
      %1142 = vrot.lane.b32.xlu0 %v952, 94
      %v1143 = vpop.permute.xlu0 %1142
      %1144 = vrot.lane.b32.xlu0 %v953, 94
      %v1145 = vpop.permute.xlu0 %1144
      %1146 = vrot.lane.b32.xlu0 %v954, 94
      %v1147 = vpop.permute.xlu0 %1146
      %1148 = vrot.lane.b32.xlu0 %v955, 94
      %v1149 = vpop.permute.xlu0 %1148
      %1150 = vrot.lane.b32.xlu0 %v956, 94
      %v1151 = vpop.permute.xlu0 %1150
      %vm1152 = vcmask 769024
      %v1153 = vsel %vm1152, %v1141, %v1143
      %v1154 = vsel %vm1152, %v1143, %v1145
      %v1155 = vsel %vm1152, %v1147, %v1149
      %v1156 = vsel %vm1152, %v1149, %v1151
      %1162 = vset.pattern.permute.xlu0 0
      %1163 = vperm.xlu0 %1162, %v815
      %v1164 = vpop.permute.xlu0 %1163
      %v1167 = vsel %vm903, %v814, 0
      %1169 = vmatprep.subr.mxu0 %v1129
      %1170 = vmatpush1.msra.mxu0 %v1128
      %1171 = vmatprep.subr.mxu0 %v1127
      %1172 = vmatpush1.msra.mxu0 %v1126
      %1173 = vmatprep.subr.mxu0 %v1108
      %1174 = vmatpush1.msra.mxu0 %v1107
      %1175 = vmatprep.subr.mxu0 %v1106
      %1176 = vmatpush1.msra.mxu0 %v1105
      %1177 = vmatprep.subr.mxu0 %v1081
      %1178 = vmatpush1.msra.mxu0 %v1080
      %1179 = vmatprep.subr.mxu0 %v1079
      %1180 = vmatpush1.msra.mxu0 %v1078
      %1181 = vmatprep.subr.mxu0 %v1054
      %1182 = vmatpush1.msra.mxu0 %v1053
      %1183 = vmatprep.subr.mxu0 %v1052
      %1184 = vmatpush1.msra.mxu0 %v1051
      %1185 = vmatprep.subr.mxu0 %v1033
      %1186 = vmatpush1.msra.mxu0 %v1032
      %1187 = vmatprep.subr.mxu0 %v1031
      %1188 = vmatpush1.msra.mxu0 %v1030
      %1189 = vmatprep.subr.mxu0 %v1006
      %1190 = vmatpush1.msra.mxu0 %v1005
      %1191 = vmatprep.subr.mxu0 %v1004
      %1192 = vmatpush1.msra.mxu0 %v1003
      %1193 = vmatprep.subr.mxu0 %v979
      %1194 = vmatpush1.msra.mxu0 %v978
      %1195 = vmatprep.subr.mxu0 %v977
      %1196 = vmatpush1.msra.mxu0 %v976
      %1197 = vmatprep.subr.mxu0 %v870
      %1198 = vmatpush1.msra.mxu0 %v869
      %1199 = vmatprep.subr.mxu0 %v868
      %1200 = vmatpush1.msra.mxu0 %v867
      %1201 = vmatprep.subr.mxu0 0.0
      %1202 = vmatpush2.msra.mxu0 0.0
      %1203 = vmatprep.subr.mxu0 0.0
      %1204 = vmatpush2.msra.mxu0 0.0
      %1205 = vmatprep.subr.mxu0 0.0
      %1206 = vmatpush2.msra.mxu0 0.0
      %1207 = vmatprep.subr.mxu0 0.0
      %1208 = vmatpush2.msra.mxu0 0.0
      %1209 = vmatprep.subr.mxu0 0.0
      %1210 = vmatpush2.msra.mxu0 0.0
      %1211 = vmatprep.subr.mxu0 0.0
      %1212 = vmatpush2.msra.mxu0 0.0
      %1213 = vmatprep.subr.mxu0 0.0
      %1214 = vmatpush2.msra.mxu0 0.0
      %1215 = vmatprep.subr.mxu0 0.0
      %1216 = vmatpush2.msra.mxu0 0.0
      %1217 = vmatprep.subr.mxu0 0.0
      %1218 = vmatpush2.msra.mxu0 0.0
      %1219 = vmatprep.subr.mxu0 0.0
      %1220 = vmatpush2.msra.mxu0 0.0
      %1221 = vmatprep.subr.mxu0 0.0
      %1222 = vmatpush2.msra.mxu0 0.0
      %1223 = vmatprep.subr.mxu0 0.0
      %1224 = vmatpush2.msra.mxu0 0.0
      %1225 = vmatprep.subr.mxu0 0.0
      %1226 = vmatpush2.msra.mxu0 0.0
      %1227 = vmatprep.subr.mxu0 0.0
      %1228 = vmatpush2.msra.mxu0 0.0
      %1229 = vmatprep.subr.mxu0 %v1156
      %1230 = vmatpush2.msra.mxu0 %v1155
      %1231 = vmatprep.subr.mxu0 %v1154
      %1232 = vmatpush2.msra.mxu0 %v1153
      %1233 = vmatprep.mubr.f32.mxu0 %v1167
      %1234 = vmatmul.mubr.f32.gmra.mxu0 %v813
      %v1235 = vpop.f32.mrf.mxu0
      %v1236 = vadd.f32 %v1164, %v1235
      %v1237 = vpop.f32.mrf.mxu0
      %v1238 = vadd.f32 %v1164, %v1237
      %1239 = vdwg.mxu0
      %v1240 = vmax.f32 %v1236, 0.0
      %v1241 = vmax.f32 %v1238, 0.0
      %v1242 = vld [vmem:[%s7] sm:$0xf]
      %v1243 = vld [vmem:[%s8] sm:$0xf]
      %1244 = vst [vmem:[#allocation3] sm:$0xff] 0.0
      %1245 = vst [vmem:[#allocation3 + $0x8] sm:$0xff] 0.0
      %1246 = vst.msk [vmem:[#allocation3 + $0x10] sm:$0xff] %vm818, 0.0
      %1249 = vrot.lane.b32.xlu0 %v1240, 17
      %v1250 = vpop.permute.xlu0 %1249
      %1251 = vrot.lane.b32.xlu0 %v1241, 17
      %v1252 = vpop.permute.xlu0 %1251
      %v1253 = vsel %vm835, %v1250, %v1252
      %1257 = vst.msk [vmem:[#allocation3] sm:$0xff] %vm844, %v1250
      %1258 = vst [vmem:[#allocation3 + $0x8] sm:$0xff] %v1253
      %1259 = vst.msk [vmem:[#allocation3 + $0x10] sm:$0xff] %vm835, %v1252
      %v1260 = vld [vmem:[#allocation3] sm:$0xff]
      %v1261 = vld [vmem:[#allocation3 + $0x8] sm:$0xff]
      %v1262 = vld [vmem:[%s9] sm:$0x3]
      %v1264 = vlaneseq
      %v1265 = vshrl.u32 %v1264, 7
      %v1266 = vsub.s32 0, %v1265
      %v1267 = vrot.slane %v1262, %v1266
      %v1268 = vlaneseq
      %v1269 = vshrl.u32 %v1268, 7
      %v1270 = vsub.s32 1, %v1269
      %v1271 = vrot.slane %v1262, %v1270
      %v1274 = vmul.f32 %v1260, %v1267
      %v1275 = vmul.f32 %v1261, %v1271
      %v1276 = vld [vmem:[#allocation3 + $0x10] sm:$0xff]
      %v1277 = vld [vmem:[%s873] sm:$0x3]
      %v1279 = vlaneseq
      %v1280 = vshrl.u32 %v1279, 7
      %v1281 = vsub.s32 0, %v1280
      %v1282 = vrot.slane %v1277, %v1281
      %v1283 = vlaneseq
      %v1284 = vshrl.u32 %v1283, 7
      %v1285 = vsub.s32 1, %v1284
      %v1286 = vrot.slane %v1277, %v1285
      %1287 = vrot.lane.b32.xlu0 %v1282, 2
      %v1288 = vpop.permute.xlu0 %1287
      %1289 = vrot.lane.b32.xlu0 %v1286, 2
      %v1290 = vpop.permute.xlu0 %1289
      %v1291 = vsel %vm888, %v1288, %v1290
      %v1295 = vmul.f32 %v1260, %v1288
      %v1296 = vmul.f32 %v1261, %v1291
      %v1297 = vmul.f32 %v1276, %v1290
      %1298 = vrot.lane.b32.xlu0 %v1267, 16
      %v1299 = vpop.permute.xlu0 %1298
      %1300 = vrot.lane.b32.xlu0 %v1271, 16
      %v1301 = vpop.permute.xlu0 %1300
      %v1302 = vsel %vm903, %v1299, %v1301
      %v1306 = vmul.f32 %v1260, %v1299
      %v1307 = vmul.f32 %v1261, %v1302
      %v1308 = vmul.f32 %v1276, %v1301
      %1309 = vrot.lane.b32.xlu0 %v1282, 18
      %v1310 = vpop.permute.xlu0 %1309
      %1311 = vrot.lane.b32.xlu0 %v1286, 18
      %v1312 = vpop.permute.xlu0 %1311
      %v1313 = vsel %vm918, %v1310, %v1312
      %v1317 = vmul.f32 %v1260, %v1310
      %v1318 = vmul.f32 %v1261, %v1313
      %v1319 = vmul.f32 %v1276, %v1312
      %1320 = vrot.lane.b32.xlu0 %v1267, 32
      %v1321 = vpop.permute.xlu0 %1320
      %1322 = vrot.lane.b32.xlu0 %v1271, 32
      %v1323 = vpop.permute.xlu0 %1322
      %v1324 = vsel %vm738, %v1321, %v1323
      %v1328 = vmul.f32 %v1260, %v1321
      %v1329 = vmul.f32 %v1261, %v1324
      %v1330 = vmul.f32 %v1276, %v1323
      %1331 = vrot.lane.b32.xlu0 %v1282, 34
      %v1332 = vpop.permute.xlu0 %1331
      %1333 = vrot.lane.b32.xlu0 %v1286, 34
      %v1334 = vpop.permute.xlu0 %1333
      %v1335 = vsel %vm818, %v1332, %v1334
      %v1339 = vmul.f32 %v1260, %v1332
      %v1340 = vmul.f32 %v1261, %v1335
      %v1341 = vmul.f32 %v1276, %v1334
      %1345 = vrot.lane.b32.xlu0 %v1260, 127
      %v1346 = vpop.permute.xlu0 %1345
      %1347 = vrot.lane.b32.xlu0 %v1261, 127
      %v1348 = vpop.permute.xlu0 %1347
      %1349 = vrot.lane.b32.xlu0 %v1276, 127
      %v1350 = vpop.permute.xlu0 %1349
      %v1351 = vsel %vm975, %v1346, %v1348
      %v1352 = vsel %vm975, %v1348, %v1350
      %1358 = vrot.lane.b32.xlu0 %v1295, 126
      %v1359 = vpop.permute.xlu0 %1358
      %1360 = vrot.lane.b32.xlu0 %v1296, 126
      %v1361 = vpop.permute.xlu0 %1360
      %1362 = vrot.lane.b32.xlu0 %v1297, 126
      %v1363 = vpop.permute.xlu0 %1362
      %v1364 = vsel %vm1002, %v1359, %v1361
      %v1365 = vsel %vm1002, %v1361, %v1363
      %1371 = vrot.lane.b32.xlu0 %v1306, 112
      %v1372 = vpop.permute.xlu0 %1371
      %1373 = vrot.lane.b32.xlu0 %v1307, 112
      %v1374 = vpop.permute.xlu0 %1373
      %1375 = vrot.lane.b32.xlu0 %v1308, 112
      %v1376 = vpop.permute.xlu0 %1375
      %v1377 = vsel %vm1029, %v1372, %v1374
      %v1378 = vsel %vm1029, %v1374, %v1376
      %1381 = vrot.lane.b32.xlu0 %v1260, 111
      %v1382 = vpop.permute.xlu0 %1381
      %1383 = vrot.lane.b32.xlu0 %v1261, 111
      %v1384 = vpop.permute.xlu0 %1383
      %1385 = vrot.lane.b32.xlu0 %v1276, 111
      %v1386 = vpop.permute.xlu0 %1385
      %v1387 = vsel %vm1050, %v1382, %v1384
      %v1388 = vsel %vm1050, %v1384, %v1386
      %1394 = vrot.lane.b32.xlu0 %v1317, 110
      %v1395 = vpop.permute.xlu0 %1394
      %1396 = vrot.lane.b32.xlu0 %v1318, 110
      %v1397 = vpop.permute.xlu0 %1396
      %1398 = vrot.lane.b32.xlu0 %v1319, 110
      %v1399 = vpop.permute.xlu0 %1398
      %v1400 = vsel %vm1077, %v1395, %v1397
      %v1401 = vsel %vm1077, %v1397, %v1399
      %1407 = vrot.lane.b32.xlu0 %v1328, 96
      %v1408 = vpop.permute.xlu0 %1407
      %1409 = vrot.lane.b32.xlu0 %v1329, 96
      %v1410 = vpop.permute.xlu0 %1409
      %1411 = vrot.lane.b32.xlu0 %v1330, 96
      %v1412 = vpop.permute.xlu0 %1411
      %v1413 = vsel %vm1104, %v1408, %v1410
      %v1414 = vsel %vm1104, %v1410, %v1412
      %1417 = vrot.lane.b32.xlu0 %v1260, 95
      %v1418 = vpop.permute.xlu0 %1417
      %1419 = vrot.lane.b32.xlu0 %v1261, 95
      %v1420 = vpop.permute.xlu0 %1419
      %1421 = vrot.lane.b32.xlu0 %v1276, 95
      %v1422 = vpop.permute.xlu0 %1421
      %v1423 = vsel %vm1125, %v1418, %v1420
      %v1424 = vsel %vm1125, %v1420, %v1422
      %1430 = vrot.lane.b32.xlu0 %v1339, 94
      %v1431 = vpop.permute.xlu0 %1430
      %1432 = vrot.lane.b32.xlu0 %v1340, 94
      %v1433 = vpop.permute.xlu0 %1432
      %1434 = vrot.lane.b32.xlu0 %v1341, 94
      %v1435 = vpop.permute.xlu0 %1434
      %v1436 = vsel %vm1152, %v1431, %v1433
      %v1437 = vsel %vm1152, %v1433, %v1435
      %1441 = vset.pattern.permute.xlu0 0
      %1442 = vperm.xlu0 %1441, %v1243
      %v1443 = vpop.permute.xlu0 %1442
      %vm1445 = vcmask 588800
      %v1447 = vsel %vm1445, %v1242, 0
      %1449 = vmatprep.subr.mxu0 0.0
      %1450 = vmatpush1.msra.mxu0 0.0
      %1451 = vmatprep.subr.mxu0 0.0
      %1452 = vmatpush1.msra.mxu0 0.0
      %1453 = vmatprep.subr.mxu0 0.0
      %1454 = vmatpush1.msra.mxu0 0.0
      %1455 = vmatprep.subr.mxu0 0.0
      %1456 = vmatpush1.msra.mxu0 0.0
      %1457 = vmatprep.subr.mxu0 0.0
      %1458 = vmatpush1.msra.mxu0 0.0
      %1459 = vmatprep.subr.mxu0 0.0
      %1460 = vmatpush1.msra.mxu0 0.0
      %1461 = vmatprep.subr.mxu0 0.0
      %1462 = vmatpush1.msra.mxu0 0.0
      %1463 = vmatprep.subr.mxu0 %v1437
      %1464 = vmatpush1.msra.mxu0 %v1436
      %1465 = vmatprep.subr.mxu0 %v1424
      %1466 = vmatpush1.msra.mxu0 %v1423
      %1467 = vmatprep.subr.mxu0 %v1414
      %1468 = vmatpush1.msra.mxu0 %v1413
      %1469 = vmatprep.subr.mxu0 %v1401
      %1470 = vmatpush1.msra.mxu0 %v1400
      %1471 = vmatprep.subr.mxu0 %v1388
      %1472 = vmatpush1.msra.mxu0 %v1387
      %1473 = vmatprep.subr.mxu0 %v1378
      %1474 = vmatpush1.msra.mxu0 %v1377
      %1475 = vmatprep.subr.mxu0 %v1365
      %1476 = vmatpush1.msra.mxu0 %v1364
      %1477 = vmatprep.subr.mxu0 %v1352
      %1478 = vmatpush1.msra.mxu0 %v1351
      %1479 = vmatprep.subr.mxu0 %v1275
      %1480 = vmatpush1.msra.mxu0 %v1274
      %1481 = vmatprep.subr.mxu0 0.0
      %1482 = vmatpush2.msra.mxu0 0.0
      %1483 = vmatprep.subr.mxu0 0.0
      %1484 = vmatpush2.msra.mxu0 0.0
      %1485 = vmatprep.subr.mxu0 0.0
      %1486 = vmatpush2.msra.mxu0 0.0
      %1487 = vmatprep.subr.mxu0 0.0
      %1488 = vmatpush2.msra.mxu0 0.0
      %1489 = vmatprep.subr.mxu0 0.0
      %1490 = vmatpush2.msra.mxu0 0.0
      %1491 = vmatprep.subr.mxu0 0.0
      %1492 = vmatpush2.msra.mxu0 0.0
      %1493 = vmatprep.subr.mxu0 0.0
      %1494 = vmatpush2.msra.mxu0 0.0
      %1495 = vmatprep.subr.mxu0 0.0
      %1496 = vmatpush2.msra.mxu0 0.0
      %1497 = vmatprep.subr.mxu0 0.0
      %1498 = vmatpush2.msra.mxu0 0.0
      %1499 = vmatprep.subr.mxu0 0.0
      %1500 = vmatpush2.msra.mxu0 0.0
      %1501 = vmatprep.subr.mxu0 0.0
      %1502 = vmatpush2.msra.mxu0 0.0
      %1503 = vmatprep.subr.mxu0 0.0
      %1504 = vmatpush2.msra.mxu0 0.0
      %1505 = vmatprep.subr.mxu0 0.0
      %1506 = vmatpush2.msra.mxu0 0.0
      %1507 = vmatprep.subr.mxu0 0.0
      %1508 = vmatpush2.msra.mxu0 0.0
      %1509 = vmatprep.subr.mxu0 0.0
      %1510 = vmatpush2.msra.mxu0 0.0
      %1511 = vmatprep.subr.mxu0 0.0
      %1512 = vmatpush2.msra.mxu0 0.0
      %1513 = vmatprep.mubr.f32.mxu0 0.0
      %1514 = vmatmul.mubr.f32.gmra.mxu0 %v1447
      %v1515 = vpop.f32.mrf.mxu0
      %v1516 = vadd.f32 %v1443, %v1515
      %v1517 = vpop.f32.mrf.mxu0
      %v1518 = vadd.f32 %v1443, %v1517
      %1519 = vdwg.mxu0
      %v1520 = vmax.f32 %v1516, 0.0
      %v1521 = vmax.f32 %v1518, 0.0
      %v1524 = vcombine.low %v1520, %v1521
      %1526 = vst [vmem:[%s376] sm:$0xff] %v1524
      %p1527 = scmp.lt.s32.totalorder %s21, 1
      %s1528 = scalar_select %p1527, %s21, 1
      %s1529 = smul.addr %s1528, 2
      %s1530 = smul.addr %s1529, 4
      %s1531 = scalar_lea.vmem %s10, %s1530
      // Predicated region
      $region61: #{unet_up_forward.1} parent=59 // pred_check
        %p1532 = pneg %p259
      $region62: #{unet_up_forward.1} parent=59 // pred_check_branch
        %1534 = sbr.rel (%p1532) target = $region64
      $region63: #{unet_up_forward.1} parent=59 // pred_region
        _
      $region64: #{unet_up_forward.1} parent=59 // pred_fallthru
        _
    $region60: #{unet_up_forward.1} parent=5 // pred_fallthru
      _
    %p1535 = scmp.le.s32.totalorder 2, %s16
    // Predicated region
    $region65: #{unet_up_forward.1} parent=5 // pred_check
      %p1536 = pneg %p1535
    $region66: #{unet_up_forward.1} parent=5 // pred_check_branch
      %1538 = sbr.rel (%p1536) target = $region68
    $region67: #{unet_up_forward.1} parent=5 // pred_region
      %s1539 = ssub.s32 %s16, 2
      // Predicated region
      $region69: #{unet_up_forward.1} parent=67 // pred_check
        %p1540 = pneg %p265
      $region70: #{unet_up_forward.1} parent=67 // pred_check_branch
        %1542 = sbr.rel (%p1540) target = $region72
      $region71: #{unet_up_forward.1} parent=67 // pred_region
        %p1543 = scmp.lt.s32.totalorder %s22, 1
        %s1544 = scalar_select %p1543, %s22, 1
        %s1545 = smul.addr %s1544, 2
        %s1546 = smul.addr %s1545, 4
        %s1547 = scalar_lea.vmem %s10, %s1546
      $region72: #{unet_up_forward.1} parent=67 // pred_fallthru
        _
    $region68: #{unet_up_forward.1} parent=5 // pred_fallthru
      _
  $region6: #{unet_up_forward.1} parent=0 // loop_footer
    %s20 = sadd.s32 1, %s16
  $region7: #{unet_up_forward.1} parent=0 // loop_footer_branch
    %15 = sbr.rel target = $region3
  $region8: #{unet_up_forward.1} parent=0 // loop_exit
    _

</llo_original>
